<compile_context>
chip_gen: v5e
topology: v5e:2x2
jax: 0.10.0
libtpu: 0.0.40
codegen_flags: <defaults>
</compile_context>

<pallas_src>
import functools

import jax
import jax.numpy as jnp
import numpy as np
from jax.experimental import pallas as pl
from jax.experimental.pallas import tpu as pltpu

# ---- hyperparameters (args) -------------------------------------------------
NET_WIDTH = 32                      # args.net_width  (W)
DEFOR_DEPTH = 2                     # args.defor_depth (D)
POSBASE_PE = 4                      # args.posebase_pe   (emb sin/cos unused downstream)
SCALE_ROT_PE = 2                    # args.scale_rotation_pe
HEAD_OUT_DIMS = (3, 3, 4, 1, 48)    # pos, scales, rotations, opacity, shs(16*3)

TN_MAX = 8192                       # max points per grid step (pad-and-trim on N)
SLAB_W = 64                         # fused input/output slab width (60 used + pad)

# Column layout of both the input slab and the output slab:
#   0:3   point / pts
#   3:4   time  (passthrough column in the output, discarded)
#   4:7   scales
#   7:11  rotations
#   11:12 opacity
#   12:60 shs (flattened 16*3)
#   60:63 zero pad
#   63    ones column (folds the first-layer bias into the matmul)
HEAD_COL_OFFSETS = (0, 4, 7, 11, 12)


def _round_up(x, m):
    return (x + m - 1) // m * m


# ---- parameter init (weights f32; packing casts to bf16) ---------------------
def init_params(key, depth, width):
    """Deterministic xavier-uniform-ish init (weights only; zero biases)."""
    params = []

    def linear(key, fan_in, fan_out):
        bound = float(np.sqrt(6.0 / (fan_in + fan_out)))
        w = jax.random.uniform(key, (fan_in, fan_out), jnp.float32, -bound, bound)
        b = jnp.zeros((1, fan_out), jnp.float32)
        return w, b

    keys = jax.random.split(key, depth + 2 * len(HEAD_OUT_DIMS))
    k = 0
    # feature_out: Linear(4, W) then (D-1) x (ReLU, Linear(W, W))
    w, b = linear(keys[k], 4, width); k += 1
    params += [w, b]
    for _ in range(depth - 1):
        w, b = linear(keys[k], width, width); k += 1
        params += [w, b]
    # heads: Sequential(ReLU, Linear(W,W), ReLU, Linear(W,out))
    for out_dim in HEAD_OUT_DIMS:
        wh, bh = linear(keys[k], width, width); k += 1
        wo, bo = linear(keys[k], width, out_dim); k += 1
        params += [wh, bh, wo, bo]
    return params


def pack_params(params, depth, width):
    """Pack the 22 small arrays into 7 slabs; weights bf16, biases f32.

    Layout:
      w0_pad  [SLAB_W, W]  bf16  rows 0:4 = Linear(4,W) weight, row 63 = b0
      (D-1) x (w_i [W,W] bf16, b_i [1,W] f32)
      wh_cat  [W, 5W]      bf16  five head hidden layers concatenated
      bh_cat  [1, 5W]      f32
      wo_pack [5W, SLAB_W] bf16  block-diagonal: head hi -> output columns
      bo_pack [1, SLAB_W]  f32
    """
    idx = 0
    w0, b0 = params[idx], params[idx + 1]; idx += 2
    w0_pad = jnp.zeros((SLAB_W, width), jnp.float32)
    w0_pad = w0_pad.at[0:4, :].set(w0)
    w0_pad = w0_pad.at[SLAB_W - 1, :].set(b0[0])       # bias via ones column 63
    packed = [w0_pad.astype(jnp.bfloat16)]

    for _ in range(depth - 1):
        w, b = params[idx], params[idx + 1]; idx += 2
        packed += [w.astype(jnp.bfloat16), b]           # bias add stays f32

    wh_list, bh_list = [], []
    wo_pack = jnp.zeros((width * len(HEAD_OUT_DIMS), SLAB_W), jnp.float32)
    bo_pack = jnp.zeros((1, SLAB_W), jnp.float32)
    for hi, (off, od) in enumerate(zip(HEAD_COL_OFFSETS, HEAD_OUT_DIMS)):
        wh, bh, wo, bo = params[idx:idx + 4]; idx += 4
        wh_list.append(wh)
        bh_list.append(bh)
        wo_pack = wo_pack.at[hi * width:(hi + 1) * width, off:off + od].set(wo)
        bo_pack = bo_pack.at[:, off:off + od].set(bo)
    wh_cat = jnp.concatenate(wh_list, axis=1).astype(jnp.bfloat16)   # [W, 5W]
    bh_cat = jnp.concatenate(bh_list, axis=1)                        # [1, 5W] f32
    packed += [wh_cat, bh_cat, wo_pack.astype(jnp.bfloat16), bo_pack]
    return packed


# ---- kernel ------------------------------------------------------------------
def make_deform_kernel(depth):
    n_hidden = 2 * (depth - 1)
    bf16 = jnp.bfloat16

    def kernel(in_ref, w0_ref, *rest):
        hidden_refs = rest[:n_hidden]
        wh_ref, bh_ref, wo_ref, bo_ref, out_ref = rest[n_hidden:]

        x = in_ref[...]                                            # [TN, 64] f32

        # feature_out: Linear(4,W) zero-padded to K=64 with b0 folded in via the
        # ones column, then (D-1) x [ReLU, Linear(W, W)].  All dots run bf16 on
        # the MXU with f32 accumulation (single pass).
        h = jnp.dot(x.astype(bf16), w0_ref[...],
                    preferred_element_type=jnp.float32)
        for li in range(depth - 1):
            h = jnp.maximum(h, 0.0)
            h = (jnp.dot(h.astype(bf16), hidden_refs[2 * li][...],
                         preferred_element_type=jnp.float32)
                 + hidden_refs[2 * li + 1][...])

        # Five heads fused: ReLU once, one [W,5W] matmul, ReLU, one block-diag
        # [5W,64] matmul that scatters each head's delta into its output columns.
        t = jnp.maximum(h, 0.0)
        t = (jnp.dot(t.astype(bf16), wh_ref[...],
                     preferred_element_type=jnp.float32)
             + bh_ref[...])
        t = jnp.maximum(t, 0.0)
        delta = (jnp.dot(t.astype(bf16), wo_ref[...],
                         preferred_element_type=jnp.float32)
                 + bo_ref[...])                                    # [TN, 64] f32

        # mask == 1 on this path; outputs are simply base + delta.
        out_ref[...] = x + delta

    return kernel


# ---- glue (matches PyTorch forward_dynamic) ----------------------------------
def poc_fre(x, poc_buf):
    """JAX version of the PyTorch poc_fre. Only the identity prefix feeds the
    deformation net, so the wrapper below skips the (dead) sin/cos work."""
    emb = (x[..., None] * poc_buf).reshape(*x.shape[:-1], -1)
    return jnp.concatenate([x, jnp.sin(emb), jnp.cos(emb)], axis=-1)


@functools.partial(jax.jit, static_argnames=("depth", "width"))
def _deform_forward_jit(point, scales, rotations, opacity, shs, times_sel,
                        params, depth, width):
    N = point.shape[0]

    # Tile size: as large as VMEM comfortably allows, but keep >= 2 grid steps
    # once N > 512 so v7x's two TensorCores both get work.
    TN = max(512, min(TN_MAX, _round_up(-(-N // 2), 512)))
    Np = _round_up(N, TN)

    # Build the padded [Np, 64] input slab in one pass (zeros init + in-place
    # column writes under jit) -- no separate jnp.pad copy of the whole slab.
    # point_emb[:, :3] == point etc. (poc_fre identity prefix); sin/cos parts
    # never reach downstream compute, so they are omitted.
    slab = jnp.zeros((Np, SLAB_W), jnp.float32)
    slab = slab.at[:N, 0:3].set(point[:, :3])
    slab = slab.at[:N, 3:4].set(times_sel[:, :1])
    slab = slab.at[:N, 4:7].set(scales[:, :3])
    slab = slab.at[:N, 7:11].set(rotations[:, :4])
    slab = slab.at[:N, 11:12].set(opacity[:, :1])
    slab = slab.at[:N, 12:60].set(shs.reshape(N, 48))
    slab = slab.at[:N, 63:64].set(1.0)          # ones column -> folded b0

    packed = pack_params(params, depth, width)
    kernel = make_deform_kernel(depth)

    in_specs = ([pl.BlockSpec((TN, SLAB_W), lambda i: (i, 0))]
                + [pl.BlockSpec(p.shape, lambda i: (0, 0)) for p in packed])
    out_specs = pl.BlockSpec((TN, SLAB_W), lambda i: (i, 0))

    out = pl.pallas_call(
        kernel,
        grid=(Np // TN,),
        in_specs=in_specs,
        out_specs=out_specs,
        out_shape=jax.ShapeDtypeStruct((Np, SLAB_W), jnp.float32),
        input_output_aliases={0: 0},            # output reuses the slab buffer
        compiler_params=pltpu.CompilerParams(
            dimension_semantics=("parallel",),
            vmem_limit_bytes=32 * 1024 * 1024),
    )(slab, *packed)

    out = out[:N]
    pts = out[:, 0:3]
    scales_o = out[:, 4:7]
    rot_o = out[:, 7:11]
    opa_o = out[:, 11:12]
    shs_o = out[:, 12:60].reshape(N, 16, 3)
    # TODO(synk): in a real pipeline, keep the 64-wide slab layout persistent
    # upstream/downstream to avoid the marshaling (concat/slice) HBM passes.
    return pts, scales_o, rot_o, opa_o, shs_o


def deform_network_forward(point, scales, rotations, opacity, shs, times_sel,
                           params, depth=DEFOR_DEPTH, width=NET_WIDTH):
    return _deform_forward_jit(point, scales, rotations, opacity, shs,
                               times_sel, params, depth=depth, width=width)


# ---- pure-JAX f32 reference (unfused weights, original semantics) -------------
def deform_network_reference(point, scales, rotations, opacity, shs, times_sel,
                             params, depth=DEFOR_DEPTH):
    N = point.shape[0]
    x = jnp.concatenate([point[:, :3], times_sel[:, :1]], axis=-1)
    idx = 0
    h = x @ params[idx] + params[idx + 1]; idx += 2
    for _ in range(depth - 1):
        h = jnp.maximum(h, 0.0) @ params[idx] + params[idx + 1]; idx += 2

    def head(i0):
        t = jnp.maximum(h, 0.0) @ params[i0] + params[i0 + 1]
        return jnp.maximum(t, 0.0) @ params[i0 + 2] + params[i0 + 3]

    dx, ds, dr, do, dshs = (head(idx), head(idx + 4), head(idx + 8),
                            head(idx + 12), head(idx + 16))
    mask = jnp.ones_like(opacity[:, :1])
    pts = point[:, :3] * mask + dx
    sc = scales[:, :3] * mask + ds
    rot = rotations[:, :4] + dr
    op = opacity[:, :1] * mask + do
    shs_o = shs * mask[:, :, None] + dshs.reshape(N, 16, 3)
    return pts, sc, rot, op, shs_o


if __name__ == "__main__":
    key = jax.random.PRNGKey(0)
    k_pt, k_sc, k_rot, k_op, k_shs, k_t, k_w = jax.random.split(key, 7)

    N = 256
    point = jax.random.normal(k_pt, (N, 3), jnp.float32)
    scales = jax.random.normal(k_sc, (N, 3), jnp.float32)
    rotations = jax.random.normal(k_rot, (N, 4), jnp.float32)
    opacity = jax.random.normal(k_op, (N, 1), jnp.float32)
    shs = jax.random.normal(k_shs, (N, 16, 3), jnp.float32)
    times_sel = jax.random.uniform(k_t, (N, 1), jnp.float32)

    params = init_params(k_w, DEFOR_DEPTH, NET_WIDTH)

    outs = deform_network_forward(point, scales, rotations, opacity, shs,
                                  times_sel, params)
    outs = jax.block_until_ready(outs)

    refs = deform_network_reference(point, scales, rotations, opacity, shs,
                                    times_sel, params)
    # Kernel matmuls are bf16 (single MXU pass) with f32 accumulation; compare
    # to the f32 reference with a bf16-appropriate tolerance.
    for o, r in zip(outs, refs):
        np.testing.assert_allclose(np.asarray(o), np.asarray(r),
                                   rtol=3e-2, atol=3e-2)

    print("KERNEL_OK")
</pallas_src>

<mosaic_0001>
module attributes {stable_mosaic.version = 11 : i64} {
  func.func @kernel(%arg0: i32, %arg1: memref<512x64xf32, #tpu.memory_space<vmem>>, %arg2: memref<64x32xbf16, #tpu.memory_space<vmem>>, %arg3: memref<32x32xbf16, #tpu.memory_space<vmem>>, %arg4: memref<1x32xf32, #tpu.memory_space<vmem>>, %arg5: memref<32x160xbf16, #tpu.memory_space<vmem>>, %arg6: memref<1x160xf32, #tpu.memory_space<vmem>>, %arg7: memref<160x64xbf16, #tpu.memory_space<vmem>>, %arg8: memref<1x64xf32, #tpu.memory_space<vmem>>, %arg9: memref<512x64xf32, #tpu.memory_space<vmem>>) attributes {dimension_semantics = [#tpu.dimension_semantics<parallel>], iteration_bounds = array<i64: 1>, scalar_prefetch = 0 : i64, scratch_operands = 0 : i64, tpu.core_type = #tpu.core_type<tc>, window_params = [{transform_indices = @transform_0, window_bounds = array<i64: 512, 64>}, {pipeline_mode = #tpu.pipeline_mode<synchronous>, transform_indices = @transform_1, window_bounds = array<i64: 64, 32>}, {pipeline_mode = #tpu.pipeline_mode<synchronous>, transform_indices = @transform_2, window_bounds = array<i64: 32, 32>}, {pipeline_mode = #tpu.pipeline_mode<synchronous>, transform_indices = @transform_3, window_bounds = array<i64: 1, 32>}, {pipeline_mode = #tpu.pipeline_mode<synchronous>, transform_indices = @transform_4, window_bounds = array<i64: 32, 160>}, {pipeline_mode = #tpu.pipeline_mode<synchronous>, transform_indices = @transform_5, window_bounds = array<i64: 1, 160>}, {pipeline_mode = #tpu.pipeline_mode<synchronous>, transform_indices = @transform_6, window_bounds = array<i64: 160, 64>}, {pipeline_mode = #tpu.pipeline_mode<synchronous>, transform_indices = @transform_7, window_bounds = array<i64: 1, 64>}, {transform_indices = @transform_8, window_bounds = array<i64: 512, 64>}]} {
    %c0 = arith.constant 0 : index
    %c0_0 = arith.constant 0 : index
    %0 = vector.load %arg1[%c0, %c0_0] : memref<512x64xf32, #tpu.memory_space<vmem>>, vector<512x64xf32>
    %1 = arith.truncf %0 : vector<512x64xf32> to vector<512x64xbf16>
    %c0_1 = arith.constant 0 : index
    %c0_2 = arith.constant 0 : index
    %2 = vector.load %arg2[%c0_1, %c0_2] : memref<64x32xbf16, #tpu.memory_space<vmem>>, vector<64x32xbf16>
    %cst = arith.constant dense<0.000000e+00> : vector<512x32xf32>
    %3 = tpu.matmul %1, %2, %cst {dimension_numbers = #tpu.dot_dimension_numbers<[1], [0], [0], [1], [0, 0, 1, 1], [], []>} : vector<512x64xbf16>, vector<64x32xbf16>, vector<512x32xf32> -> vector<512x32xf32>
    %cst_3 = arith.constant 0.000000e+00 : f32
    %4 = vector.broadcast %cst_3 : f32 to vector<512x32xf32>
    %5 = arith.maximumf %3, %4 : vector<512x32xf32>
    %6 = arith.truncf %5 : vector<512x32xf32> to vector<512x32xbf16>
    %c0_4 = arith.constant 0 : index
    %c0_5 = arith.constant 0 : index
    %7 = vector.load %arg3[%c0_4, %c0_5] : memref<32x32xbf16, #tpu.memory_space<vmem>>, vector<32x32xbf16>
    %cst_6 = arith.constant dense<0.000000e+00> : vector<512x32xf32>
    %8 = tpu.matmul %6, %7, %cst_6 {dimension_numbers = #tpu.dot_dimension_numbers<[1], [0], [0], [1], [0, 0, 1, 1], [], []>} : vector<512x32xbf16>, vector<32x32xbf16>, vector<512x32xf32> -> vector<512x32xf32>
    %c0_7 = arith.constant 0 : index
    %c0_8 = arith.constant 0 : index
    %9 = vector.load %arg4[%c0_7, %c0_8] : memref<1x32xf32, #tpu.memory_space<vmem>>, vector<1x32xf32>
    %10 = vector.broadcast %9 : vector<1x32xf32> to vector<512x32xf32>
    %11 = arith.addf %8, %10 : vector<512x32xf32>
    %cst_9 = arith.constant 0.000000e+00 : f32
    %12 = vector.broadcast %cst_9 : f32 to vector<512x32xf32>
    %13 = arith.maximumf %11, %12 : vector<512x32xf32>
    %14 = arith.truncf %13 : vector<512x32xf32> to vector<512x32xbf16>
    %c0_10 = arith.constant 0 : index
    %c0_11 = arith.constant 0 : index
    %15 = vector.load %arg5[%c0_10, %c0_11] : memref<32x160xbf16, #tpu.memory_space<vmem>>, vector<32x160xbf16>
    %cst_12 = arith.constant dense<0.000000e+00> : vector<512x160xf32>
    %16 = tpu.matmul %14, %15, %cst_12 {dimension_numbers = #tpu.dot_dimension_numbers<[1], [0], [0], [1], [0, 0, 1, 1], [], []>} : vector<512x32xbf16>, vector<32x160xbf16>, vector<512x160xf32> -> vector<512x160xf32>
    %c0_13 = arith.constant 0 : index
    %c0_14 = arith.constant 0 : index
    %17 = vector.load %arg6[%c0_13, %c0_14] : memref<1x160xf32, #tpu.memory_space<vmem>>, vector<1x160xf32>
    %18 = vector.broadcast %17 : vector<1x160xf32> to vector<512x160xf32>
    %19 = arith.addf %16, %18 : vector<512x160xf32>
    %cst_15 = arith.constant 0.000000e+00 : f32
    %20 = vector.broadcast %cst_15 : f32 to vector<512x160xf32>
    %21 = arith.maximumf %19, %20 : vector<512x160xf32>
    %22 = arith.truncf %21 : vector<512x160xf32> to vector<512x160xbf16>
    %c0_16 = arith.constant 0 : index
    %c0_17 = arith.constant 0 : index
    %23 = vector.load %arg7[%c0_16, %c0_17] : memref<160x64xbf16, #tpu.memory_space<vmem>>, vector<160x64xbf16>
    %cst_18 = arith.constant dense<0.000000e+00> : vector<512x64xf32>
    %24 = tpu.matmul %22, %23, %cst_18 {dimension_numbers = #tpu.dot_dimension_numbers<[1], [0], [0], [1], [0, 0, 1, 1], [], []>} : vector<512x160xbf16>, vector<160x64xbf16>, vector<512x64xf32> -> vector<512x64xf32>
    %c0_19 = arith.constant 0 : index
    %c0_20 = arith.constant 0 : index
    %25 = vector.load %arg8[%c0_19, %c0_20] : memref<1x64xf32, #tpu.memory_space<vmem>>, vector<1x64xf32>
    %26 = vector.broadcast %25 : vector<1x64xf32> to vector<512x64xf32>
    %27 = arith.addf %24, %26 : vector<512x64xf32>
    %28 = arith.addf %0, %27 : vector<512x64xf32>
    %c0_21 = arith.constant 0 : index
    %c0_22 = arith.constant 0 : index
    %29 = vector.load %arg9[%c0_21, %c0_22] : memref<512x64xf32, #tpu.memory_space<vmem>>, vector<512x64xf32>
    tpu.vector_store %arg9[%c0_21, %c0_22], %28 {strides = array<i32>} : memref<512x64xf32, #tpu.memory_space<vmem>>, vector<512x64xf32>,
    return
  }
  func.func @transform_0(%arg0: i32) -> (i32, i32) {
    %c0_i32 = arith.constant 0 : i32
    %c0_i32_0 = arith.constant 0 : i32
    return %arg0, %c0_i32 : i32, i32
  }
  func.func @transform_1(%arg0: i32) -> (i32, i32) {
    %c0_i32 = arith.constant 0 : i32
    %c0_i32_0 = arith.constant 0 : i32
    %c0_i32_1 = arith.constant 0 : i32
    return %c0_i32, %c0_i32_0 : i32, i32
  }
  func.func @transform_2(%arg0: i32) -> (i32, i32) {
    %c0_i32 = arith.constant 0 : i32
    %c0_i32_0 = arith.constant 0 : i32
    %c0_i32_1 = arith.constant 0 : i32
    return %c0_i32, %c0_i32_0 : i32, i32
  }
  func.func @transform_3(%arg0: i32) -> (i32, i32) {
    %c0_i32 = arith.constant 0 : i32
    %c0_i32_0 = arith.constant 0 : i32
    %c0_i32_1 = arith.constant 0 : i32
    return %c0_i32, %c0_i32_0 : i32, i32
  }
  func.func @transform_4(%arg0: i32) -> (i32, i32) {
    %c0_i32 = arith.constant 0 : i32
    %c0_i32_0 = arith.constant 0 : i32
    %c0_i32_1 = arith.constant 0 : i32
    return %c0_i32, %c0_i32_0 : i32, i32
  }
  func.func @transform_5(%arg0: i32) -> (i32, i32) {
    %c0_i32 = arith.constant 0 : i32
    %c0_i32_0 = arith.constant 0 : i32
    %c0_i32_1 = arith.constant 0 : i32
    return %c0_i32, %c0_i32_0 : i32, i32
  }
  func.func @transform_6(%arg0: i32) -> (i32, i32) {
    %c0_i32 = arith.constant 0 : i32
    %c0_i32_0 = arith.constant 0 : i32
    %c0_i32_1 = arith.constant 0 : i32
    return %c0_i32, %c0_i32_0 : i32, i32
  }
  func.func @transform_7(%arg0: i32) -> (i32, i32) {
    %c0_i32 = arith.constant 0 : i32
    %c0_i32_0 = arith.constant 0 : i32
    %c0_i32_1 = arith.constant 0 : i32
    return %c0_i32, %c0_i32_0 : i32, i32
  }
  func.func @transform_8(%arg0: i32) -> (i32, i32) {
    %c0_i32 = arith.constant 0 : i32
    %c0_i32_0 = arith.constant 0 : i32
    return %arg0, %c0_i32 : i32, i32
  }
}

</mosaic_0001>

<llo_original>
// kernel: _deform_forward_jit.1
$region0: #{_deform_forward_jit.1}
  #allocation0 [shape = 'u32[]', space=smem, size = 0x4, offset = 0x4, fixed_abs, tag = 'smem constant byte address 0x4 - core index']
  #allocation1 [shape = 'u32[72,128]{1,0:T(1,128)}', space=vmem, size = 0x9000, scoped, tag = 'internal scratch']
  %s0 = inlined_call_operand.vmem [shape: f32[512,64], index: 0, kind: input, shape index: {}, may-alias: {0,8}]
  %s1 = inlined_call_operand.vmem [shape: bf16[64,32], index: 1, kind: input, shape index: {}]
  %s2 = inlined_call_operand.vmem [shape: bf16[32,32], index: 2, kind: input, shape index: {}]
  %s3 = inlined_call_operand.vmem [shape: f32[1,32], index: 3, kind: input, shape index: {}]
  %s4 = inlined_call_operand.vmem [shape: bf16[32,160], index: 4, kind: input, shape index: {}]
  %s5 = inlined_call_operand.vmem [shape: f32[1,160], index: 5, kind: input, shape index: {}]
  %s6 = inlined_call_operand.vmem [shape: bf16[160,64], index: 6, kind: input, shape index: {}]
  %s7 = inlined_call_operand.vmem [shape: f32[1,64], index: 7, kind: input, shape index: {}]
  %s8 = inlined_call_operand.vmem [shape: f32[512,64], index: 8, kind: output, shape index: {}, may-alias: {0,8}]
  %s9 = sld [smem:[#allocation0]]
  $region42: #{_deform_forward_jit.1} parent=0
    _
  %s11 = ssub.s32 1, %s9
  %s12 = scalar_select 0, %s11, %s9
  // Predicated region
  $region2: #{_deform_forward_jit.1} parent=0 // pred_check
    _
  $region3: #{_deform_forward_jit.1} parent=0 // pred_check_branch
    %14 = sbr.rel (0) target = $region5
  $region4: #{_deform_forward_jit.1} parent=0 // pred_region
    _
  $region5: #{_deform_forward_jit.1} parent=0 // pred_fallthru
    _
  // Predicated region
  $region6: #{_deform_forward_jit.1} parent=0 // pred_check
    _
  $region7: #{_deform_forward_jit.1} parent=0 // pred_check_branch
    %16 = sbr.rel (0) target = $region9
  $region8: #{_deform_forward_jit.1} parent=0 // pred_region
    _
  $region9: #{_deform_forward_jit.1} parent=0 // pred_fallthru
    _
  // Predicated region
  $region10: #{_deform_forward_jit.1} parent=0 // pred_check
    _
  $region11: #{_deform_forward_jit.1} parent=0 // pred_check_branch
    %18 = sbr.rel (0) target = $region13
  $region12: #{_deform_forward_jit.1} parent=0 // pred_region
    _
  $region13: #{_deform_forward_jit.1} parent=0 // pred_fallthru
    _
  // Predicated region
  $region14: #{_deform_forward_jit.1} parent=0 // pred_check
    _
  $region15: #{_deform_forward_jit.1} parent=0 // pred_check_branch
    %20 = sbr.rel (0) target = $region17
  $region16: #{_deform_forward_jit.1} parent=0 // pred_region
    _
  $region17: #{_deform_forward_jit.1} parent=0 // pred_fallthru
    _
  // Predicated region
  $region18: #{_deform_forward_jit.1} parent=0 // pred_check
    _
  $region19: #{_deform_forward_jit.1} parent=0 // pred_check_branch
    %22 = sbr.rel (0) target = $region21
  $region20: #{_deform_forward_jit.1} parent=0 // pred_region
    _
  $region21: #{_deform_forward_jit.1} parent=0 // pred_fallthru
    _
  // Predicated region
  $region22: #{_deform_forward_jit.1} parent=0 // pred_check
    _
  $region23: #{_deform_forward_jit.1} parent=0 // pred_check_branch
    %24 = sbr.rel (0) target = $region25
  $region24: #{_deform_forward_jit.1} parent=0 // pred_region
    _
  $region25: #{_deform_forward_jit.1} parent=0 // pred_fallthru
    _
  // Predicated region
  $region26: #{_deform_forward_jit.1} parent=0 // pred_check
    _
  $region27: #{_deform_forward_jit.1} parent=0 // pred_check_branch
    %26 = sbr.rel (0) target = $region29
  $region28: #{_deform_forward_jit.1} parent=0 // pred_region
    _
  $region29: #{_deform_forward_jit.1} parent=0 // pred_fallthru
    _
  // Predicated region
  $region30: #{_deform_forward_jit.1} parent=0 // pred_check
    _
  $region31: #{_deform_forward_jit.1} parent=0 // pred_check_branch
    %28 = sbr.rel (0) target = $region33
  $region32: #{_deform_forward_jit.1} parent=0 // pred_region
    _
  $region33: #{_deform_forward_jit.1} parent=0 // pred_fallthru
    _
  %v30 = vld [vmem:[%s0] sm:$0xff]
  %v31 = vld [vmem:[%s0 + $0x8] sm:$0xff]
  %v32 = vld [vmem:[%s0 + $0x10] sm:$0xff]
  %v33 = vld [vmem:[%s0 + $0x18] sm:$0xff]
  %v34 = vld [vmem:[%s0 + $0x20] sm:$0xff]
  %v35 = vld [vmem:[%s0 + $0x28] sm:$0xff]
  %v36 = vld [vmem:[%s0 + $0x30] sm:$0xff]
  %v37 = vld [vmem:[%s0 + $0x38] sm:$0xff]
  %v38 = vld [vmem:[%s0 + $0x40] sm:$0xff]
  %v39 = vld [vmem:[%s0 + $0x48] sm:$0xff]
  %v40 = vld [vmem:[%s0 + $0x50] sm:$0xff]
  %v41 = vld [vmem:[%s0 + $0x58] sm:$0xff]
  %v42 = vld [vmem:[%s0 + $0x60] sm:$0xff]
  %v43 = vld [vmem:[%s0 + $0x68] sm:$0xff]
  %v44 = vld [vmem:[%s0 + $0x70] sm:$0xff]
  %v45 = vld [vmem:[%s0 + $0x78] sm:$0xff]
  %v46 = vld [vmem:[%s0 + $0x80] sm:$0xff]
  %v47 = vld [vmem:[%s0 + $0x88] sm:$0xff]
  %v48 = vld [vmem:[%s0 + $0x90] sm:$0xff]
  %v49 = vld [vmem:[%s0 + $0x98] sm:$0xff]
  %v50 = vld [vmem:[%s0 + $0xa0] sm:$0xff]
  %v51 = vld [vmem:[%s0 + $0xa8] sm:$0xff]
  %v52 = vld [vmem:[%s0 + $0xb0] sm:$0xff]
  %v53 = vld [vmem:[%s0 + $0xb8] sm:$0xff]
  %v54 = vld [vmem:[%s0 + $0xc0] sm:$0xff]
  %v55 = vld [vmem:[%s0 + $0xc8] sm:$0xff]
  %v56 = vld [vmem:[%s0 + $0xd0] sm:$0xff]
  %v57 = vld [vmem:[%s0 + $0xd8] sm:$0xff]
  %v58 = vld [vmem:[%s0 + $0xe0] sm:$0xff]
  %v59 = vld [vmem:[%s0 + $0xe8] sm:$0xff]
  %v60 = vld [vmem:[%s0 + $0xf0] sm:$0xff]
  %v61 = vld [vmem:[%s0 + $0xf8] sm:$0xff]
  %v62 = vld [vmem:[%s0 + $0x100] sm:$0xff]
  %v63 = vld [vmem:[%s0 + $0x108] sm:$0xff]
  %v64 = vld [vmem:[%s0 + $0x110] sm:$0xff]
  %v65 = vld [vmem:[%s0 + $0x118] sm:$0xff]
  %v66 = vld [vmem:[%s0 + $0x120] sm:$0xff]
  %v67 = vld [vmem:[%s0 + $0x128] sm:$0xff]
  %v68 = vld [vmem:[%s0 + $0x130] sm:$0xff]
  %v69 = vld [vmem:[%s0 + $0x138] sm:$0xff]
  %v70 = vld [vmem:[%s0 + $0x140] sm:$0xff]
  %v71 = vld [vmem:[%s0 + $0x148] sm:$0xff]
  %v72 = vld [vmem:[%s0 + $0x150] sm:$0xff]
  %v73 = vld [vmem:[%s0 + $0x158] sm:$0xff]
  %v74 = vld [vmem:[%s0 + $0x160] sm:$0xff]
  %v75 = vld [vmem:[%s0 + $0x168] sm:$0xff]
  %v76 = vld [vmem:[%s0 + $0x170] sm:$0xff]
  %v77 = vld [vmem:[%s0 + $0x178] sm:$0xff]
  %v78 = vld [vmem:[%s0 + $0x180] sm:$0xff]
  %v79 = vld [vmem:[%s0 + $0x188] sm:$0xff]
  %v80 = vld [vmem:[%s0 + $0x190] sm:$0xff]
  %v81 = vld [vmem:[%s0 + $0x198] sm:$0xff]
  %v82 = vld [vmem:[%s0 + $0x1a0] sm:$0xff]
  %v83 = vld [vmem:[%s0 + $0x1a8] sm:$0xff]
  %v84 = vld [vmem:[%s0 + $0x1b0] sm:$0xff]
  %v85 = vld [vmem:[%s0 + $0x1b8] sm:$0xff]
  %v86 = vld [vmem:[%s0 + $0x1c0] sm:$0xff]
  %v87 = vld [vmem:[%s0 + $0x1c8] sm:$0xff]
  %v88 = vld [vmem:[%s0 + $0x1d0] sm:$0xff]
  %v89 = vld [vmem:[%s0 + $0x1d8] sm:$0xff]
  %v90 = vld [vmem:[%s0 + $0x1e0] sm:$0xff]
  %v91 = vld [vmem:[%s0 + $0x1e8] sm:$0xff]
  %v92 = vld [vmem:[%s0 + $0x1f0] sm:$0xff]
  %v93 = vld [vmem:[%s0 + $0x1f8] sm:$0xff]
  %v94 = vpack.c.bf16 %v31, %v30
  %v95 = vpack.c.bf16 %v33, %v32
  %v96 = vpack.c.bf16 %v35, %v34
  %v97 = vpack.c.bf16 %v37, %v36
  %v98 = vpack.c.bf16 %v39, %v38
  %v99 = vpack.c.bf16 %v41, %v40
  %v100 = vpack.c.bf16 %v43, %v42
  %v101 = vpack.c.bf16 %v45, %v44
  %v102 = vpack.c.bf16 %v47, %v46
  %v103 = vpack.c.bf16 %v49, %v48
  %v104 = vpack.c.bf16 %v51, %v50
  %v105 = vpack.c.bf16 %v53, %v52
  %v106 = vpack.c.bf16 %v55, %v54
  %v107 = vpack.c.bf16 %v57, %v56
  %v108 = vpack.c.bf16 %v59, %v58
  %v109 = vpack.c.bf16 %v61, %v60
  %v110 = vpack.c.bf16 %v63, %v62
  %v111 = vpack.c.bf16 %v65, %v64
  %v112 = vpack.c.bf16 %v67, %v66
  %v113 = vpack.c.bf16 %v69, %v68
  %v114 = vpack.c.bf16 %v71, %v70
  %v115 = vpack.c.bf16 %v73, %v72
  %v116 = vpack.c.bf16 %v75, %v74
  %v117 = vpack.c.bf16 %v77, %v76
  %v118 = vpack.c.bf16 %v79, %v78
  %v119 = vpack.c.bf16 %v81, %v80
  %v120 = vpack.c.bf16 %v83, %v82
  %v121 = vpack.c.bf16 %v85, %v84
  %v122 = vpack.c.bf16 %v87, %v86
  %v123 = vpack.c.bf16 %v89, %v88
  %v124 = vpack.c.bf16 %v91, %v90
  %v125 = vpack.c.bf16 %v93, %v92
  %v126 = vld [vmem:[%s1] sm:$0xf]
  %v127 = vld [vmem:[%s1 + $0x4] sm:$0xf]
  %v128 = vld [vmem:[%s1 + $0x8] sm:$0xf]
  %v129 = vld [vmem:[%s1 + $0xc] sm:$0xf]
  %v130 = vld [vmem:[%s1 + $0x10] sm:$0xf]
  %v131 = vld [vmem:[%s1 + $0x14] sm:$0xf]
  %v132 = vld [vmem:[%s1 + $0x18] sm:$0xf]
  %v133 = vld [vmem:[%s1 + $0x1c] sm:$0xf]
  %v142 = vunpack.c.l.b16 %v126
  %v143 = vunpack.c.l.b16 %v127
  %v144 = vunpack.c.l.b16 %v128
  %v145 = vunpack.c.l.b16 %v129
  %v146 = vunpack.c.l.b16 %v130
  %v147 = vunpack.c.l.b16 %v131
  %v148 = vunpack.c.l.b16 %v132
  %v149 = vunpack.c.l.b16 %v133
  %v150 = vpack.c.b16 %v143, %v142
  %v151 = vpack.c.b16 %v145, %v144
  %v152 = vpack.c.b16 %v147, %v146
  %v153 = vpack.c.b16 %v149, %v148
  %vm158 = vcmask 523264
  %v160 = vsel %vm158, %v94, 0
  %v163 = vsel %vm158, %v95, 0
  %v166 = vsel %vm158, %v96, 0
  %v169 = vsel %vm158, %v97, 0
  %v172 = vsel %vm158, %v98, 0
  %v175 = vsel %vm158, %v99, 0
  %v178 = vsel %vm158, %v100, 0
  %v181 = vsel %vm158, %v101, 0
  %v184 = vsel %vm158, %v102, 0
  %v187 = vsel %vm158, %v103, 0
  %v190 = vsel %vm158, %v104, 0
  %v193 = vsel %vm158, %v105, 0
  %v196 = vsel %vm158, %v106, 0
  %v199 = vsel %vm158, %v107, 0
  %v202 = vsel %vm158, %v108, 0
  %v205 = vsel %vm158, %v109, 0
  %v208 = vsel %vm158, %v110, 0
  %v211 = vsel %vm158, %v111, 0
  %v214 = vsel %vm158, %v112, 0
  %v217 = vsel %vm158, %v113, 0
  %v220 = vsel %vm158, %v114, 0
  %v223 = vsel %vm158, %v115, 0
  %v226 = vsel %vm158, %v116, 0
  %v229 = vsel %vm158, %v117, 0
  %v232 = vsel %vm158, %v118, 0
  %v235 = vsel %vm158, %v119, 0
  %v238 = vsel %vm158, %v120, 0
  %v241 = vsel %vm158, %v121, 0
  %v244 = vsel %vm158, %v122, 0
  %v247 = vsel %vm158, %v123, 0
  %v250 = vsel %vm158, %v124, 0
  %v253 = vsel %vm158, %v125, 0
  %255 = vmatpush.bf16.msra.mxu0 0
  %256 = vmatpush.bf16.msra.mxu0 0
  %257 = vmatpush.bf16.msra.mxu0 0
  %258 = vmatpush.bf16.msra.mxu0 0
  %259 = vmatpush.bf16.msra.mxu0 %v153
  %260 = vmatpush.bf16.msra.mxu0 %v152
  %261 = vmatpush.bf16.msra.mxu0 %v151
  %262 = vmatpush.bf16.msra.mxu0 %v150
  %263 = vmatmul.bf16.gmra.mxu0 %v160
  %v264 = vpop.f32.mrf.mxu0
  %v265 = vadd.f32 0.0, %v264
  %v266 = vpop.f32.mrf.mxu0
  %v267 = vadd.f32 0.0, %v266
  %268 = vmatmul.bf16.gmra.mxu0 %v163
  %v269 = vpop.f32.mrf.mxu0
  %v270 = vadd.f32 0.0, %v269
  %v271 = vpop.f32.mrf.mxu0
  %v272 = vadd.f32 0.0, %v271
  %273 = vmatmul.bf16.gmra.mxu0 %v166
  %v274 = vpop.f32.mrf.mxu0
  %v275 = vadd.f32 0.0, %v274
  %v276 = vpop.f32.mrf.mxu0
  %v277 = vadd.f32 0.0, %v276
  %278 = vmatmul.bf16.gmra.mxu0 %v169
  %v279 = vpop.f32.mrf.mxu0
  %v280 = vadd.f32 0.0, %v279
  %v281 = vpop.f32.mrf.mxu0
  %v282 = vadd.f32 0.0, %v281
  %283 = vmatmul.bf16.gmra.mxu0 %v172
  %v284 = vpop.f32.mrf.mxu0
  %v285 = vadd.f32 0.0, %v284
  %v286 = vpop.f32.mrf.mxu0
  %v287 = vadd.f32 0.0, %v286
  %288 = vmatmul.bf16.gmra.mxu0 %v175
  %v289 = vpop.f32.mrf.mxu0
  %v290 = vadd.f32 0.0, %v289
  %v291 = vpop.f32.mrf.mxu0
  %v292 = vadd.f32 0.0, %v291
  %293 = vmatmul.bf16.gmra.mxu0 %v178
  %v294 = vpop.f32.mrf.mxu0
  %v295 = vadd.f32 0.0, %v294
  %v296 = vpop.f32.mrf.mxu0
  %v297 = vadd.f32 0.0, %v296
  %298 = vmatmul.bf16.gmra.mxu0 %v181
  %v299 = vpop.f32.mrf.mxu0
  %v300 = vadd.f32 0.0, %v299
  %v301 = vpop.f32.mrf.mxu0
  %v302 = vadd.f32 0.0, %v301
  %303 = vmatmul.bf16.gmra.mxu0 %v184
  %v304 = vpop.f32.mrf.mxu0
  %v305 = vadd.f32 0.0, %v304
  %v306 = vpop.f32.mrf.mxu0
  %v307 = vadd.f32 0.0, %v306
  %308 = vmatmul.bf16.gmra.mxu0 %v187
  %v309 = vpop.f32.mrf.mxu0
  %v310 = vadd.f32 0.0, %v309
  %v311 = vpop.f32.mrf.mxu0
  %v312 = vadd.f32 0.0, %v311
  %313 = vmatmul.bf16.gmra.mxu0 %v190
  %v314 = vpop.f32.mrf.mxu0
  %v315 = vadd.f32 0.0, %v314
  %v316 = vpop.f32.mrf.mxu0
  %v317 = vadd.f32 0.0, %v316
  %318 = vmatmul.bf16.gmra.mxu0 %v193
  %v319 = vpop.f32.mrf.mxu0
  %v320 = vadd.f32 0.0, %v319
  %v321 = vpop.f32.mrf.mxu0
  %v322 = vadd.f32 0.0, %v321
  %323 = vmatmul.bf16.gmra.mxu0 %v196
  %v324 = vpop.f32.mrf.mxu0
  %v325 = vadd.f32 0.0, %v324
  %v326 = vpop.f32.mrf.mxu0
  %v327 = vadd.f32 0.0, %v326
  %328 = vmatmul.bf16.gmra.mxu0 %v199
  %v329 = vpop.f32.mrf.mxu0
  %v330 = vadd.f32 0.0, %v329
  %v331 = vpop.f32.mrf.mxu0
  %v332 = vadd.f32 0.0, %v331
  %333 = vmatmul.bf16.gmra.mxu0 %v202
  %v334 = vpop.f32.mrf.mxu0
  %v335 = vadd.f32 0.0, %v334
  %v336 = vpop.f32.mrf.mxu0
  %v337 = vadd.f32 0.0, %v336
  %338 = vmatmul.bf16.gmra.mxu0 %v205
  %v339 = vpop.f32.mrf.mxu0
  %v340 = vadd.f32 0.0, %v339
  %v341 = vpop.f32.mrf.mxu0
  %v342 = vadd.f32 0.0, %v341
  %343 = vmatmul.bf16.gmra.mxu0 %v208
  %v344 = vpop.f32.mrf.mxu0
  %v345 = vadd.f32 0.0, %v344
  %v346 = vpop.f32.mrf.mxu0
  %v347 = vadd.f32 0.0, %v346
  %348 = vmatmul.bf16.gmra.mxu0 %v211
  %v349 = vpop.f32.mrf.mxu0
  %v350 = vadd.f32 0.0, %v349
  %v351 = vpop.f32.mrf.mxu0
  %v352 = vadd.f32 0.0, %v351
  %353 = vmatmul.bf16.gmra.mxu0 %v214
  %v354 = vpop.f32.mrf.mxu0
  %v355 = vadd.f32 0.0, %v354
  %v356 = vpop.f32.mrf.mxu0
  %v357 = vadd.f32 0.0, %v356
  %358 = vmatmul.bf16.gmra.mxu0 %v217
  %v359 = vpop.f32.mrf.mxu0
  %v360 = vadd.f32 0.0, %v359
  %v361 = vpop.f32.mrf.mxu0
  %v362 = vadd.f32 0.0, %v361
  %363 = vmatmul.bf16.gmra.mxu0 %v220
  %v364 = vpop.f32.mrf.mxu0
  %v365 = vadd.f32 0.0, %v364
  %v366 = vpop.f32.mrf.mxu0
  %v367 = vadd.f32 0.0, %v366
  %368 = vmatmul.bf16.gmra.mxu0 %v223
  %v369 = vpop.f32.mrf.mxu0
  %v370 = vadd.f32 0.0, %v369
  %v371 = vpop.f32.mrf.mxu0
  %v372 = vadd.f32 0.0, %v371
  %373 = vmatmul.bf16.gmra.mxu0 %v226
  %v374 = vpop.f32.mrf.mxu0
  %v375 = vadd.f32 0.0, %v374
  %v376 = vpop.f32.mrf.mxu0
  %v377 = vadd.f32 0.0, %v376
  %378 = vmatmul.bf16.gmra.mxu0 %v229
  %v379 = vpop.f32.mrf.mxu0
  %v380 = vadd.f32 0.0, %v379
  %v381 = vpop.f32.mrf.mxu0
  %v382 = vadd.f32 0.0, %v381
  %383 = vmatmul.bf16.gmra.mxu0 %v232
  %v384 = vpop.f32.mrf.mxu0
  %v385 = vadd.f32 0.0, %v384
  %v386 = vpop.f32.mrf.mxu0
  %v387 = vadd.f32 0.0, %v386
  %388 = vmatmul.bf16.gmra.mxu0 %v235
  %v389 = vpop.f32.mrf.mxu0
  %v390 = vadd.f32 0.0, %v389
  %v391 = vpop.f32.mrf.mxu0
  %v392 = vadd.f32 0.0, %v391
  %393 = vmatmul.bf16.gmra.mxu0 %v238
  %v394 = vpop.f32.mrf.mxu0
  %v395 = vadd.f32 0.0, %v394
  %v396 = vpop.f32.mrf.mxu0
  %v397 = vadd.f32 0.0, %v396
  %398 = vmatmul.bf16.gmra.mxu0 %v241
  %v399 = vpop.f32.mrf.mxu0
  %v400 = vadd.f32 0.0, %v399
  %v401 = vpop.f32.mrf.mxu0
  %v402 = vadd.f32 0.0, %v401
  %403 = vmatmul.bf16.gmra.mxu0 %v244
  %v404 = vpop.f32.mrf.mxu0
  %v405 = vadd.f32 0.0, %v404
  %v406 = vpop.f32.mrf.mxu0
  %v407 = vadd.f32 0.0, %v406
  %408 = vmatmul.bf16.gmra.mxu0 %v247
  %v409 = vpop.f32.mrf.mxu0
  %v410 = vadd.f32 0.0, %v409
  %v411 = vpop.f32.mrf.mxu0
  %v412 = vadd.f32 0.0, %v411
  %413 = vmatmul.bf16.gmra.mxu0 %v250
  %v414 = vpop.f32.mrf.mxu0
  %v415 = vadd.f32 0.0, %v414
  %v416 = vpop.f32.mrf.mxu0
  %v417 = vadd.f32 0.0, %v416
  %418 = vmatmul.bf16.gmra.mxu0 %v253
  %v419 = vpop.f32.mrf.mxu0
  %v420 = vadd.f32 0.0, %v419
  %v421 = vpop.f32.mrf.mxu0
  %v422 = vadd.f32 0.0, %v421
  %423 = vdwg.mxu0
  %v424 = vmax.f32 %v265, 0.0
  %v425 = vmax.f32 %v267, 0.0
  %v426 = vmax.f32 %v270, 0.0
  %v427 = vmax.f32 %v272, 0.0
  %v428 = vmax.f32 %v275, 0.0
  %v429 = vmax.f32 %v277, 0.0
  %v430 = vmax.f32 %v280, 0.0
  %v431 = vmax.f32 %v282, 0.0
  %v432 = vmax.f32 %v285, 0.0
  %v433 = vmax.f32 %v287, 0.0
  %v434 = vmax.f32 %v290, 0.0
  %v435 = vmax.f32 %v292, 0.0
  %v436 = vmax.f32 %v295, 0.0
  %v437 = vmax.f32 %v297, 0.0
  %v438 = vmax.f32 %v300, 0.0
  %v439 = vmax.f32 %v302, 0.0
  %v440 = vmax.f32 %v305, 0.0
  %v441 = vmax.f32 %v307, 0.0
  %v442 = vmax.f32 %v310, 0.0
  %v443 = vmax.f32 %v312, 0.0
  %v444 = vmax.f32 %v315, 0.0
  %v445 = vmax.f32 %v317, 0.0
  %v446 = vmax.f32 %v320, 0.0
  %v447 = vmax.f32 %v322, 0.0
  %v448 = vmax.f32 %v325, 0.0
  %v449 = vmax.f32 %v327, 0.0
  %v450 = vmax.f32 %v330, 0.0
  %v451 = vmax.f32 %v332, 0.0
  %v452 = vmax.f32 %v335, 0.0
  %v453 = vmax.f32 %v337, 0.0
  %v454 = vmax.f32 %v340, 0.0
  %v455 = vmax.f32 %v342, 0.0
  %v456 = vmax.f32 %v345, 0.0
  %v457 = vmax.f32 %v347, 0.0
  %v458 = vmax.f32 %v350, 0.0
  %v459 = vmax.f32 %v352, 0.0
  %v460 = vmax.f32 %v355, 0.0
  %v461 = vmax.f32 %v357, 0.0
  %v462 = vmax.f32 %v360, 0.0
  %v463 = vmax.f32 %v362, 0.0
  %v464 = vmax.f32 %v365, 0.0
  %v465 = vmax.f32 %v367, 0.0
  %v466 = vmax.f32 %v370, 0.0
  %v467 = vmax.f32 %v372, 0.0
  %v468 = vmax.f32 %v375, 0.0
  %v469 = vmax.f32 %v377, 0.0
  %v470 = vmax.f32 %v380, 0.0
  %v471 = vmax.f32 %v382, 0.0
  %v472 = vmax.f32 %v385, 0.0
  %v473 = vmax.f32 %v387, 0.0
  %v474 = vmax.f32 %v390, 0.0
  %v475 = vmax.f32 %v392, 0.0
  %v476 = vmax.f32 %v395, 0.0
  %v477 = vmax.f32 %v397, 0.0
  %v478 = vmax.f32 %v400, 0.0
  %v479 = vmax.f32 %v402, 0.0
  %v480 = vmax.f32 %v405, 0.0
  %v481 = vmax.f32 %v407, 0.0
  %v482 = vmax.f32 %v410, 0.0
  %v483 = vmax.f32 %v412, 0.0
  %v484 = vmax.f32 %v415, 0.0
  %v485 = vmax.f32 %v417, 0.0
  %v486 = vmax.f32 %v420, 0.0
  %v487 = vmax.f32 %v422, 0.0
  %v488 = vpack.c.bf16 %v425, %v424
  %v489 = vpack.c.bf16 %v427, %v426
  %v490 = vpack.c.bf16 %v429, %v428
  %v491 = vpack.c.bf16 %v431, %v430
  %v492 = vpack.c.bf16 %v433, %v432
  %v493 = vpack.c.bf16 %v435, %v434
  %v494 = vpack.c.bf16 %v437, %v436
  %v495 = vpack.c.bf16 %v439, %v438
  %v496 = vpack.c.bf16 %v441, %v440
  %v497 = vpack.c.bf16 %v443, %v442
  %v498 = vpack.c.bf16 %v445, %v444
  %v499 = vpack.c.bf16 %v447, %v446
  %v500 = vpack.c.bf16 %v449, %v448
  %v501 = vpack.c.bf16 %v451, %v450
  %v502 = vpack.c.bf16 %v453, %v452
  %v503 = vpack.c.bf16 %v455, %v454
  %v504 = vpack.c.bf16 %v457, %v456
  %v505 = vpack.c.bf16 %v459, %v458
  %v506 = vpack.c.bf16 %v461, %v460
  %v507 = vpack.c.bf16 %v463, %v462
  %v508 = vpack.c.bf16 %v465, %v464
  %v509 = vpack.c.bf16 %v467, %v466
  %v510 = vpack.c.bf16 %v469, %v468
  %v511 = vpack.c.bf16 %v471, %v470
  %v512 = vpack.c.bf16 %v473, %v472
  %v513 = vpack.c.bf16 %v475, %v474
  %v514 = vpack.c.bf16 %v477, %v476
  %v515 = vpack.c.bf16 %v479, %v478
  %v516 = vpack.c.bf16 %v481, %v480
  %v517 = vpack.c.bf16 %v483, %v482
  %v518 = vpack.c.bf16 %v485, %v484
  %v519 = vpack.c.bf16 %v487, %v486
  %v520 = vld [vmem:[%s2] sm:$0xf]
  %v521 = vld [vmem:[%s2 + $0x4] sm:$0xf]
  %v522 = vld [vmem:[%s2 + $0x8] sm:$0xf]
  %v523 = vld [vmem:[%s2 + $0xc] sm:$0xf]
  %v524 = vld [vmem:[%s3] sm:$0x1]
  %v526 = vperm.slane %v524, 0
  %v532 = vunpack.c.l.b16 %v520
  %v533 = vunpack.c.l.b16 %v521
  %v534 = vunpack.c.l.b16 %v522
  %v535 = vunpack.c.l.b16 %v523
  %v536 = vpack.c.b16 %v533, %v532
  %v537 = vpack.c.b16 %v535, %v534
  %vm540 = vcmask 261120
  %v542 = vsel %vm540, %v488, 0
  %v545 = vsel %vm540, %v489, 0
  %v548 = vsel %vm540, %v490, 0
  %v551 = vsel %vm540, %v491, 0
  %v554 = vsel %vm540, %v492, 0
  %v557 = vsel %vm540, %v493, 0
  %v560 = vsel %vm540, %v494, 0
  %v563 = vsel %vm540, %v495, 0
  %v566 = vsel %vm540, %v496, 0
  %v569 = vsel %vm540, %v497, 0
  %v572 = vsel %vm540, %v498, 0
  %v575 = vsel %vm540, %v499, 0
  %v578 = vsel %vm540, %v500, 0
  %v581 = vsel %vm540, %v501, 0
  %v584 = vsel %vm540, %v502, 0
  %v587 = vsel %vm540, %v503, 0
  %v590 = vsel %vm540, %v504, 0
  %v593 = vsel %vm540, %v505, 0
  %v596 = vsel %vm540, %v506, 0
  %v599 = vsel %vm540, %v507, 0
  %v602 = vsel %vm540, %v508, 0
  %v605 = vsel %vm540, %v509, 0
  %v608 = vsel %vm540, %v510, 0
  %v611 = vsel %vm540, %v511, 0
  %v614 = vsel %vm540, %v512, 0
  %v617 = vsel %vm540, %v513, 0
  %v620 = vsel %vm540, %v514, 0
  %v623 = vsel %vm540, %v515, 0
  %v626 = vsel %vm540, %v516, 0
  %v629 = vsel %vm540, %v517, 0
  %v632 = vsel %vm540, %v518, 0
  %v635 = vsel %vm540, %v519, 0
  %637 = vmatpush.bf16.msra.mxu0 0
  %638 = vmatpush.bf16.msra.mxu0 0
  %639 = vmatpush.bf16.msra.mxu0 0
  %640 = vmatpush.bf16.msra.mxu0 0
  %641 = vmatpush.bf16.msra.mxu0 0
  %642 = vmatpush.bf16.msra.mxu0 0
  %643 = vmatpush.bf16.msra.mxu0 %v537
  %644 = vmatpush.bf16.msra.mxu0 %v536
  %645 = vmatmul.bf16.gmra.mxu0 %v542
  %v646 = vpop.f32.mrf.mxu0
  %v647 = vadd.f32 %v526, %v646
  %v648 = vpop.f32.mrf.mxu0
  %v649 = vadd.f32 %v526, %v648
  %650 = vmatmul.bf16.gmra.mxu0 %v545
  %v651 = vpop.f32.mrf.mxu0
  %v652 = vadd.f32 %v526, %v651
  %v653 = vpop.f32.mrf.mxu0
  %v654 = vadd.f32 %v526, %v653
  %655 = vmatmul.bf16.gmra.mxu0 %v548
  %v656 = vpop.f32.mrf.mxu0
  %v657 = vadd.f32 %v526, %v656
  %v658 = vpop.f32.mrf.mxu0
  %v659 = vadd.f32 %v526, %v658
  %660 = vmatmul.bf16.gmra.mxu0 %v551
  %v661 = vpop.f32.mrf.mxu0
  %v662 = vadd.f32 %v526, %v661
  %v663 = vpop.f32.mrf.mxu0
  %v664 = vadd.f32 %v526, %v663
  %665 = vmatmul.bf16.gmra.mxu0 %v554
  %v666 = vpop.f32.mrf.mxu0
  %v667 = vadd.f32 %v526, %v666
  %v668 = vpop.f32.mrf.mxu0
  %v669 = vadd.f32 %v526, %v668
  %670 = vmatmul.bf16.gmra.mxu0 %v557
  %v671 = vpop.f32.mrf.mxu0
  %v672 = vadd.f32 %v526, %v671
  %v673 = vpop.f32.mrf.mxu0
  %v674 = vadd.f32 %v526, %v673
  %675 = vmatmul.bf16.gmra.mxu0 %v560
  %v676 = vpop.f32.mrf.mxu0
  %v677 = vadd.f32 %v526, %v676
  %v678 = vpop.f32.mrf.mxu0
  %v679 = vadd.f32 %v526, %v678
  %680 = vmatmul.bf16.gmra.mxu0 %v563
  %v681 = vpop.f32.mrf.mxu0
  %v682 = vadd.f32 %v526, %v681
  %v683 = vpop.f32.mrf.mxu0
  %v684 = vadd.f32 %v526, %v683
  %685 = vmatmul.bf16.gmra.mxu0 %v566
  %v686 = vpop.f32.mrf.mxu0
  %v687 = vadd.f32 %v526, %v686
  %v688 = vpop.f32.mrf.mxu0
  %v689 = vadd.f32 %v526, %v688
  %690 = vmatmul.bf16.gmra.mxu0 %v569
  %v691 = vpop.f32.mrf.mxu0
  %v692 = vadd.f32 %v526, %v691
  %v693 = vpop.f32.mrf.mxu0
  %v694 = vadd.f32 %v526, %v693
  %695 = vmatmul.bf16.gmra.mxu0 %v572
  %v696 = vpop.f32.mrf.mxu0
  %v697 = vadd.f32 %v526, %v696
  %v698 = vpop.f32.mrf.mxu0
  %v699 = vadd.f32 %v526, %v698
  %700 = vmatmul.bf16.gmra.mxu0 %v575
  %v701 = vpop.f32.mrf.mxu0
  %v702 = vadd.f32 %v526, %v701
  %v703 = vpop.f32.mrf.mxu0
  %v704 = vadd.f32 %v526, %v703
  %705 = vmatmul.bf16.gmra.mxu0 %v578
  %v706 = vpop.f32.mrf.mxu0
  %v707 = vadd.f32 %v526, %v706
  %v708 = vpop.f32.mrf.mxu0
  %v709 = vadd.f32 %v526, %v708
  %710 = vmatmul.bf16.gmra.mxu0 %v581
  %v711 = vpop.f32.mrf.mxu0
  %v712 = vadd.f32 %v526, %v711
  %v713 = vpop.f32.mrf.mxu0
  %v714 = vadd.f32 %v526, %v713
  %715 = vmatmul.bf16.gmra.mxu0 %v584
  %v716 = vpop.f32.mrf.mxu0
  %v717 = vadd.f32 %v526, %v716
  %v718 = vpop.f32.mrf.mxu0
  %v719 = vadd.f32 %v526, %v718
  %720 = vmatmul.bf16.gmra.mxu0 %v587
  %v721 = vpop.f32.mrf.mxu0
  %v722 = vadd.f32 %v526, %v721
  %v723 = vpop.f32.mrf.mxu0
  %v724 = vadd.f32 %v526, %v723
  %725 = vmatmul.bf16.gmra.mxu0 %v590
  %v726 = vpop.f32.mrf.mxu0
  %v727 = vadd.f32 %v526, %v726
  %v728 = vpop.f32.mrf.mxu0
  %v729 = vadd.f32 %v526, %v728
  %730 = vmatmul.bf16.gmra.mxu0 %v593
  %v731 = vpop.f32.mrf.mxu0
  %v732 = vadd.f32 %v526, %v731
  %v733 = vpop.f32.mrf.mxu0
  %v734 = vadd.f32 %v526, %v733
  %735 = vmatmul.bf16.gmra.mxu0 %v596
  %v736 = vpop.f32.mrf.mxu0
  %v737 = vadd.f32 %v526, %v736
  %v738 = vpop.f32.mrf.mxu0
  %v739 = vadd.f32 %v526, %v738
  %740 = vmatmul.bf16.gmra.mxu0 %v599
  %v741 = vpop.f32.mrf.mxu0
  %v742 = vadd.f32 %v526, %v741
  %v743 = vpop.f32.mrf.mxu0
  %v744 = vadd.f32 %v526, %v743
  %745 = vmatmul.bf16.gmra.mxu0 %v602
  %v746 = vpop.f32.mrf.mxu0
  %v747 = vadd.f32 %v526, %v746
  %v748 = vpop.f32.mrf.mxu0
  %v749 = vadd.f32 %v526, %v748
  %750 = vmatmul.bf16.gmra.mxu0 %v605
  %v751 = vpop.f32.mrf.mxu0
  %v752 = vadd.f32 %v526, %v751
  %v753 = vpop.f32.mrf.mxu0
  %v754 = vadd.f32 %v526, %v753
  %755 = vmatmul.bf16.gmra.mxu0 %v608
  %v756 = vpop.f32.mrf.mxu0
  %v757 = vadd.f32 %v526, %v756
  %v758 = vpop.f32.mrf.mxu0
  %v759 = vadd.f32 %v526, %v758
  %760 = vmatmul.bf16.gmra.mxu0 %v611
  %v761 = vpop.f32.mrf.mxu0
  %v762 = vadd.f32 %v526, %v761
  %v763 = vpop.f32.mrf.mxu0
  %v764 = vadd.f32 %v526, %v763
  %765 = vmatmul.bf16.gmra.mxu0 %v614
  %v766 = vpop.f32.mrf.mxu0
  %v767 = vadd.f32 %v526, %v766
  %v768 = vpop.f32.mrf.mxu0
  %v769 = vadd.f32 %v526, %v768
  %770 = vmatmul.bf16.gmra.mxu0 %v617
  %v771 = vpop.f32.mrf.mxu0
  %v772 = vadd.f32 %v526, %v771
  %v773 = vpop.f32.mrf.mxu0
  %v774 = vadd.f32 %v526, %v773
  %775 = vmatmul.bf16.gmra.mxu0 %v620
  %v776 = vpop.f32.mrf.mxu0
  %v777 = vadd.f32 %v526, %v776
  %v778 = vpop.f32.mrf.mxu0
  %v779 = vadd.f32 %v526, %v778
  %780 = vmatmul.bf16.gmra.mxu0 %v623
  %v781 = vpop.f32.mrf.mxu0
  %v782 = vadd.f32 %v526, %v781
  %v783 = vpop.f32.mrf.mxu0
  %v784 = vadd.f32 %v526, %v783
  %785 = vmatmul.bf16.gmra.mxu0 %v626
  %v786 = vpop.f32.mrf.mxu0
  %v787 = vadd.f32 %v526, %v786
  %v788 = vpop.f32.mrf.mxu0
  %v789 = vadd.f32 %v526, %v788
  %790 = vmatmul.bf16.gmra.mxu0 %v629
  %v791 = vpop.f32.mrf.mxu0
  %v792 = vadd.f32 %v526, %v791
  %v793 = vpop.f32.mrf.mxu0
  %v794 = vadd.f32 %v526, %v793
  %795 = vmatmul.bf16.gmra.mxu0 %v632
  %v796 = vpop.f32.mrf.mxu0
  %v797 = vadd.f32 %v526, %v796
  %v798 = vpop.f32.mrf.mxu0
  %v799 = vadd.f32 %v526, %v798
  %800 = vmatmul.bf16.gmra.mxu0 %v635
  %v801 = vpop.f32.mrf.mxu0
  %v802 = vadd.f32 %v526, %v801
  %v803 = vpop.f32.mrf.mxu0
  %v804 = vadd.f32 %v526, %v803
  %805 = vdwg.mxu0
  %v806 = vmax.f32 %v647, 0.0
  %v807 = vmax.f32 %v649, 0.0
  %v808 = vmax.f32 %v652, 0.0
  %v809 = vmax.f32 %v654, 0.0
  %v810 = vmax.f32 %v657, 0.0
  %v811 = vmax.f32 %v659, 0.0
  %v812 = vmax.f32 %v662, 0.0
  %v813 = vmax.f32 %v664, 0.0
  %v814 = vmax.f32 %v667, 0.0
  %v815 = vmax.f32 %v669, 0.0
  %v816 = vmax.f32 %v672, 0.0
  %v817 = vmax.f32 %v674, 0.0
  %v818 = vmax.f32 %v677, 0.0
  %v819 = vmax.f32 %v679, 0.0
  %v820 = vmax.f32 %v682, 0.0
  %v821 = vmax.f32 %v684, 0.0
  %v822 = vmax.f32 %v687, 0.0
  %v823 = vmax.f32 %v689, 0.0
  %v824 = vmax.f32 %v692, 0.0
  %v825 = vmax.f32 %v694, 0.0
  %v826 = vmax.f32 %v697, 0.0
  %v827 = vmax.f32 %v699, 0.0
  %v828 = vmax.f32 %v702, 0.0
  %v829 = vmax.f32 %v704, 0.0
  %v830 = vmax.f32 %v707, 0.0
  %v831 = vmax.f32 %v709, 0.0
  %v832 = vmax.f32 %v712, 0.0
  %v833 = vmax.f32 %v714, 0.0
  %v834 = vmax.f32 %v717, 0.0
  %v835 = vmax.f32 %v719, 0.0
  %v836 = vmax.f32 %v722, 0.0
  %v837 = vmax.f32 %v724, 0.0
  %v838 = vmax.f32 %v727, 0.0
  %v839 = vmax.f32 %v729, 0.0
  %v840 = vmax.f32 %v732, 0.0
  %v841 = vmax.f32 %v734, 0.0
  %v842 = vmax.f32 %v737, 0.0
  %v843 = vmax.f32 %v739, 0.0
  %v844 = vmax.f32 %v742, 0.0
  %v845 = vmax.f32 %v744, 0.0
  %v846 = vmax.f32 %v747, 0.0
  %v847 = vmax.f32 %v749, 0.0
  %v848 = vmax.f32 %v752, 0.0
  %v849 = vmax.f32 %v754, 0.0
  %v850 = vmax.f32 %v757, 0.0
  %v851 = vmax.f32 %v759, 0.0
  %v852 = vmax.f32 %v762, 0.0
  %v853 = vmax.f32 %v764, 0.0
  %v854 = vmax.f32 %v767, 0.0
  %v855 = vmax.f32 %v769, 0.0
  %v856 = vmax.f32 %v772, 0.0
  %v857 = vmax.f32 %v774, 0.0
  %v858 = vmax.f32 %v777, 0.0
  %v859 = vmax.f32 %v779, 0.0
  %v860 = vmax.f32 %v782, 0.0
  %v861 = vmax.f32 %v784, 0.0
  %v862 = vmax.f32 %v787, 0.0
  %v863 = vmax.f32 %v789, 0.0
  %v864 = vmax.f32 %v792, 0.0
  %v865 = vmax.f32 %v794, 0.0
  %v866 = vmax.f32 %v797, 0.0
  %v867 = vmax.f32 %v799, 0.0
  %v868 = vmax.f32 %v802, 0.0
  %v869 = vmax.f32 %v804, 0.0
  %v870 = vpack.c.bf16 %v807, %v806
  %v871 = vpack.c.bf16 %v809, %v808
  %v872 = vpack.c.bf16 %v811, %v810
  %v873 = vpack.c.bf16 %v813, %v812
  %v874 = vpack.c.bf16 %v815, %v814
  %v875 = vpack.c.bf16 %v817, %v816
  %v876 = vpack.c.bf16 %v819, %v818
  %v877 = vpack.c.bf16 %v821, %v820
  %v878 = vpack.c.bf16 %v823, %v822
  %v879 = vpack.c.bf16 %v825, %v824
  %v880 = vpack.c.bf16 %v827, %v826
  %v881 = vpack.c.bf16 %v829, %v828
  %v882 = vpack.c.bf16 %v831, %v830
  %v883 = vpack.c.bf16 %v833, %v832
  %v884 = vpack.c.bf16 %v835, %v834
  %v885 = vpack.c.bf16 %v837, %v836
  %v886 = vpack.c.bf16 %v839, %v838
  %v887 = vpack.c.bf16 %v841, %v840
  %v888 = vpack.c.bf16 %v843, %v842
  %v889 = vpack.c.bf16 %v845, %v844
  %v890 = vpack.c.bf16 %v847, %v846
  %v891 = vpack.c.bf16 %v849, %v848
  %v892 = vpack.c.bf16 %v851, %v850
  %v893 = vpack.c.bf16 %v853, %v852
  %v894 = vpack.c.bf16 %v855, %v854
  %v895 = vpack.c.bf16 %v857, %v856
  %v896 = vpack.c.bf16 %v859, %v858
  %v897 = vpack.c.bf16 %v861, %v860
  %v898 = vpack.c.bf16 %v863, %v862
  %v899 = vpack.c.bf16 %v865, %v864
  %v900 = vpack.c.bf16 %v867, %v866
  %v901 = vpack.c.bf16 %v869, %v868
  %v902 = vld [vmem:[%s4] sm:$0xff]
  %v903 = vld [vmem:[%s4 + $0x8] sm:$0xff]
  %v904 = vld [vmem:[%s4 + $0x10] sm:$0xff]
  %v905 = vld [vmem:[%s4 + $0x18] sm:$0xff]
  %v906 = vld [vmem:[%s5] sm:$0x3]
  %v908 = vperm.slane %v906, 0
  %v909 = vperm.slane %v906, 1
  %v916 = vunpack.c.l.b16 %v902
  %v917 = vunpack.c.h.b16 %v902
  %v918 = vunpack.c.l.b16 %v903
  %v919 = vunpack.c.h.b16 %v903
  %v920 = vunpack.c.l.b16 %v904
  %v921 = vunpack.c.h.b16 %v904
  %v922 = vunpack.c.l.b16 %v905
  %v923 = vunpack.c.h.b16 %v905
  %v924 = vpack.c.b16 %v918, %v916
  %v925 = vpack.c.b16 %v919, %v917
  %v926 = vpack.c.b16 %v922, %v920
  %v927 = vpack.c.b16 %v923, %v921
  %v933 = vsel %vm540, %v870, 0
  %v936 = vsel %vm540, %v871, 0
  %v939 = vsel %vm540, %v872, 0
  %v942 = vsel %vm540, %v873, 0
  %v945 = vsel %vm540, %v874, 0
  %v948 = vsel %vm540, %v875, 0
  %v951 = vsel %vm540, %v876, 0
  %v954 = vsel %vm540, %v877, 0
  %v957 = vsel %vm540, %v878, 0
  %v960 = vsel %vm540, %v879, 0
  %v963 = vsel %vm540, %v880, 0
  %v966 = vsel %vm540, %v881, 0
  %v969 = vsel %vm540, %v882, 0
  %v972 = vsel %vm540, %v883, 0
  %v975 = vsel %vm540, %v884, 0
  %v978 = vsel %vm540, %v885, 0
  %v981 = vsel %vm540, %v886, 0
  %v984 = vsel %vm540, %v887, 0
  %v987 = vsel %vm540, %v888, 0
  %v990 = vsel %vm540, %v889, 0
  %v993 = vsel %vm540, %v890, 0
  %v996 = vsel %vm540, %v891, 0
  %v999 = vsel %vm540, %v892, 0
  %v1002 = vsel %vm540, %v893, 0
  %v1005 = vsel %vm540, %v894, 0
  %v1008 = vsel %vm540, %v895, 0
  %v1011 = vsel %vm540, %v896, 0
  %v1014 = vsel %vm540, %v897, 0
  %v1017 = vsel %vm540, %v898, 0
  %v1020 = vsel %vm540, %v899, 0
  %v1023 = vsel %vm540, %v900, 0
  %v1026 = vsel %vm540, %v901, 0
  %1028 = vmatpush.bf16.msra.mxu0 0
  %1029 = vmatpush.bf16.msra.mxu0 0
  %1030 = vmatpush.bf16.msra.mxu0 0
  %1031 = vmatpush.bf16.msra.mxu0 0
  %1032 = vmatpush.bf16.msra.mxu0 0
  %1033 = vmatpush.bf16.msra.mxu0 0
  %1034 = vmatpush.bf16.msra.mxu0 %v926
  %1035 = vmatpush.bf16.msra.mxu0 %v924
  %1036 = vmatmul.bf16.gmra.mxu0 %v933
  %v1037 = vpop.f32.mrf.mxu0
  %v1038 = vadd.f32 %v908, %v1037
  %v1039 = vpop.f32.mrf.mxu0
  %v1040 = vadd.f32 %v908, %v1039
  %1041 = vmatmul.bf16.gmra.mxu0 %v936
  %v1042 = vpop.f32.mrf.mxu0
  %v1043 = vadd.f32 %v908, %v1042
  %v1044 = vpop.f32.mrf.mxu0
  %v1045 = vadd.f32 %v908, %v1044
  %1046 = vmatmul.bf16.gmra.mxu0 %v939
  %v1047 = vpop.f32.mrf.mxu0
  %v1048 = vadd.f32 %v908, %v1047
  %v1049 = vpop.f32.mrf.mxu0
  %v1050 = vadd.f32 %v908, %v1049
  %1051 = vmatmul.bf16.gmra.mxu0 %v942
  %v1052 = vpop.f32.mrf.mxu0
  %v1053 = vadd.f32 %v908, %v1052
  %v1054 = vpop.f32.mrf.mxu0
  %v1055 = vadd.f32 %v908, %v1054
  %1056 = vmatmul.bf16.gmra.mxu0 %v945
  %v1057 = vpop.f32.mrf.mxu0
  %v1058 = vadd.f32 %v908, %v1057
  %v1059 = vpop.f32.mrf.mxu0
  %v1060 = vadd.f32 %v908, %v1059
  %1061 = vmatmul.bf16.gmra.mxu0 %v948
  %v1062 = vpop.f32.mrf.mxu0
  %v1063 = vadd.f32 %v908, %v1062
  %v1064 = vpop.f32.mrf.mxu0
  %v1065 = vadd.f32 %v908, %v1064
  %1066 = vmatmul.bf16.gmra.mxu0 %v951
  %v1067 = vpop.f32.mrf.mxu0
  %v1068 = vadd.f32 %v908, %v1067
  %v1069 = vpop.f32.mrf.mxu0
  %v1070 = vadd.f32 %v908, %v1069
  %1071 = vmatmul.bf16.gmra.mxu0 %v954
  %v1072 = vpop.f32.mrf.mxu0
  %v1073 = vadd.f32 %v908, %v1072
  %v1074 = vpop.f32.mrf.mxu0
  %v1075 = vadd.f32 %v908, %v1074
  %1076 = vmatmul.bf16.gmra.mxu0 %v957
  %v1077 = vpop.f32.mrf.mxu0
  %v1078 = vadd.f32 %v908, %v1077
  %v1079 = vpop.f32.mrf.mxu0
  %v1080 = vadd.f32 %v908, %v1079
  %1081 = vmatmul.bf16.gmra.mxu0 %v960
  %v1082 = vpop.f32.mrf.mxu0
  %v1083 = vadd.f32 %v908, %v1082
  %v1084 = vpop.f32.mrf.mxu0
  %v1085 = vadd.f32 %v908, %v1084
  %1086 = vmatmul.bf16.gmra.mxu0 %v963
  %v1087 = vpop.f32.mrf.mxu0
  %v1088 = vadd.f32 %v908, %v1087
  %v1089 = vpop.f32.mrf.mxu0
  %v1090 = vadd.f32 %v908, %v1089
  %1091 = vmatmul.bf16.gmra.mxu0 %v966
  %v1092 = vpop.f32.mrf.mxu0
  %v1093 = vadd.f32 %v908, %v1092
  %v1094 = vpop.f32.mrf.mxu0
  %v1095 = vadd.f32 %v908, %v1094
  %1096 = vmatmul.bf16.gmra.mxu0 %v969
  %v1097 = vpop.f32.mrf.mxu0
  %v1098 = vadd.f32 %v908, %v1097
  %v1099 = vpop.f32.mrf.mxu0
  %v1100 = vadd.f32 %v908, %v1099
  %1101 = vmatmul.bf16.gmra.mxu0 %v972
  %v1102 = vpop.f32.mrf.mxu0
  %v1103 = vadd.f32 %v908, %v1102
  %v1104 = vpop.f32.mrf.mxu0
  %v1105 = vadd.f32 %v908, %v1104
  %1106 = vmatmul.bf16.gmra.mxu0 %v975
  %v1107 = vpop.f32.mrf.mxu0
  %v1108 = vadd.f32 %v908, %v1107
  %v1109 = vpop.f32.mrf.mxu0
  %v1110 = vadd.f32 %v908, %v1109
  %1111 = vmatmul.bf16.gmra.mxu0 %v978
  %v1112 = vpop.f32.mrf.mxu0
  %v1113 = vadd.f32 %v908, %v1112
  %v1114 = vpop.f32.mrf.mxu0
  %v1115 = vadd.f32 %v908, %v1114
  %1116 = vmatmul.bf16.gmra.mxu0 %v981
  %v1117 = vpop.f32.mrf.mxu0
  %v1118 = vadd.f32 %v908, %v1117
  %v1119 = vpop.f32.mrf.mxu0
  %v1120 = vadd.f32 %v908, %v1119
  %1121 = vmatmul.bf16.gmra.mxu0 %v984
  %v1122 = vpop.f32.mrf.mxu0
  %v1123 = vadd.f32 %v908, %v1122
  %v1124 = vpop.f32.mrf.mxu0
  %v1125 = vadd.f32 %v908, %v1124
  %1126 = vmatmul.bf16.gmra.mxu0 %v987
  %v1127 = vpop.f32.mrf.mxu0
  %v1128 = vadd.f32 %v908, %v1127
  %v1129 = vpop.f32.mrf.mxu0
  %v1130 = vadd.f32 %v908, %v1129
  %1131 = vmatmul.bf16.gmra.mxu0 %v990
  %v1132 = vpop.f32.mrf.mxu0
  %v1133 = vadd.f32 %v908, %v1132
  %v1134 = vpop.f32.mrf.mxu0
  %v1135 = vadd.f32 %v908, %v1134
  %1136 = vmatmul.bf16.gmra.mxu0 %v993
  %v1137 = vpop.f32.mrf.mxu0
  %v1138 = vadd.f32 %v908, %v1137
  %v1139 = vpop.f32.mrf.mxu0
  %v1140 = vadd.f32 %v908, %v1139
  %1141 = vmatmul.bf16.gmra.mxu0 %v996
  %v1142 = vpop.f32.mrf.mxu0
  %v1143 = vadd.f32 %v908, %v1142
  %v1144 = vpop.f32.mrf.mxu0
  %v1145 = vadd.f32 %v908, %v1144
  %1146 = vmatmul.bf16.gmra.mxu0 %v999
  %v1147 = vpop.f32.mrf.mxu0
  %v1148 = vadd.f32 %v908, %v1147
  %v1149 = vpop.f32.mrf.mxu0
  %v1150 = vadd.f32 %v908, %v1149
  %1151 = vmatmul.bf16.gmra.mxu0 %v1002
  %v1152 = vpop.f32.mrf.mxu0
  %v1153 = vadd.f32 %v908, %v1152
  %v1154 = vpop.f32.mrf.mxu0
  %v1155 = vadd.f32 %v908, %v1154
  %1156 = vmatmul.bf16.gmra.mxu0 %v1005
  %v1157 = vpop.f32.mrf.mxu0
  %v1158 = vadd.f32 %v908, %v1157
  %v1159 = vpop.f32.mrf.mxu0
  %v1160 = vadd.f32 %v908, %v1159
  %1161 = vmatmul.bf16.gmra.mxu0 %v1008
  %v1162 = vpop.f32.mrf.mxu0
  %v1163 = vadd.f32 %v908, %v1162
  %v1164 = vpop.f32.mrf.mxu0
  %v1165 = vadd.f32 %v908, %v1164
  %1166 = vmatmul.bf16.gmra.mxu0 %v1011
  %v1167 = vpop.f32.mrf.mxu0
  %v1168 = vadd.f32 %v908, %v1167
  %v1169 = vpop.f32.mrf.mxu0
  %v1170 = vadd.f32 %v908, %v1169
  %1171 = vmatmul.bf16.gmra.mxu0 %v1014
  %v1172 = vpop.f32.mrf.mxu0
  %v1173 = vadd.f32 %v908, %v1172
  %v1174 = vpop.f32.mrf.mxu0
  %v1175 = vadd.f32 %v908, %v1174
  %1176 = vmatmul.bf16.gmra.mxu0 %v1017
  %v1177 = vpop.f32.mrf.mxu0
  %v1178 = vadd.f32 %v908, %v1177
  %v1179 = vpop.f32.mrf.mxu0
  %v1180 = vadd.f32 %v908, %v1179
  %1181 = vmatmul.bf16.gmra.mxu0 %v1020
  %v1182 = vpop.f32.mrf.mxu0
  %v1183 = vadd.f32 %v908, %v1182
  %v1184 = vpop.f32.mrf.mxu0
  %v1185 = vadd.f32 %v908, %v1184
  %1186 = vmatmul.bf16.gmra.mxu0 %v1023
  %v1187 = vpop.f32.mrf.mxu0
  %v1188 = vadd.f32 %v908, %v1187
  %v1189 = vpop.f32.mrf.mxu0
  %v1190 = vadd.f32 %v908, %v1189
  %1191 = vmatmul.bf16.gmra.mxu0 %v1026
  %v1192 = vpop.f32.mrf.mxu0
  %v1193 = vadd.f32 %v908, %v1192
  %v1194 = vpop.f32.mrf.mxu0
  %v1195 = vadd.f32 %v908, %v1194
  %1196 = vdwg.mxu0
  %1197 = vmatpush.bf16.msra.mxu0 0
  %1198 = vmatpush.bf16.msra.mxu0 0
  %1199 = vmatpush.bf16.msra.mxu0 0
  %1200 = vmatpush.bf16.msra.mxu0 0
  %1201 = vmatpush.bf16.msra.mxu0 0
  %1202 = vmatpush.bf16.msra.mxu0 0
  %1203 = vmatpush.bf16.msra.mxu0 %v927
  %1204 = vmatpush.bf16.msra.mxu0 %v925
  %1205 = vmatmul.bf16.gmra.mxu0 %v933
  %v1206 = vpop.f32.mrf.mxu0
  %v1207 = vadd.f32 %v909, %v1206
  %v1208 = vpop.f32.mrf.mxu0
  %v1209 = vadd.f32 %v909, %v1208
  %1210 = vmatmul.bf16.gmra.mxu0 %v936
  %v1211 = vpop.f32.mrf.mxu0
  %v1212 = vadd.f32 %v909, %v1211
  %v1213 = vpop.f32.mrf.mxu0
  %v1214 = vadd.f32 %v909, %v1213
  %1215 = vmatmul.bf16.gmra.mxu0 %v939
  %v1216 = vpop.f32.mrf.mxu0
  %v1217 = vadd.f32 %v909, %v1216
  %v1218 = vpop.f32.mrf.mxu0
  %v1219 = vadd.f32 %v909, %v1218
  %1220 = vmatmul.bf16.gmra.mxu0 %v942
  %v1221 = vpop.f32.mrf.mxu0
  %v1222 = vadd.f32 %v909, %v1221
  %v1223 = vpop.f32.mrf.mxu0
  %v1224 = vadd.f32 %v909, %v1223
  %1225 = vmatmul.bf16.gmra.mxu0 %v945
  %v1226 = vpop.f32.mrf.mxu0
  %v1227 = vadd.f32 %v909, %v1226
  %v1228 = vpop.f32.mrf.mxu0
  %v1229 = vadd.f32 %v909, %v1228
  %1230 = vmatmul.bf16.gmra.mxu0 %v948
  %v1231 = vpop.f32.mrf.mxu0
  %v1232 = vadd.f32 %v909, %v1231
  %v1233 = vpop.f32.mrf.mxu0
  %v1234 = vadd.f32 %v909, %v1233
  %1235 = vmatmul.bf16.gmra.mxu0 %v951
  %v1236 = vpop.f32.mrf.mxu0
  %v1237 = vadd.f32 %v909, %v1236
  %v1238 = vpop.f32.mrf.mxu0
  %v1239 = vadd.f32 %v909, %v1238
  %1240 = vmatmul.bf16.gmra.mxu0 %v954
  %v1241 = vpop.f32.mrf.mxu0
  %v1242 = vadd.f32 %v909, %v1241
  %v1243 = vpop.f32.mrf.mxu0
  %v1244 = vadd.f32 %v909, %v1243
  %1245 = vmatmul.bf16.gmra.mxu0 %v957
  %v1246 = vpop.f32.mrf.mxu0
  %v1247 = vadd.f32 %v909, %v1246
  %v1248 = vpop.f32.mrf.mxu0
  %v1249 = vadd.f32 %v909, %v1248
  %1250 = vmatmul.bf16.gmra.mxu0 %v960
  %v1251 = vpop.f32.mrf.mxu0
  %v1252 = vadd.f32 %v909, %v1251
  %v1253 = vpop.f32.mrf.mxu0
  %v1254 = vadd.f32 %v909, %v1253
  %1255 = vmatmul.bf16.gmra.mxu0 %v963
  %v1256 = vpop.f32.mrf.mxu0
  %v1257 = vadd.f32 %v909, %v1256
  %v1258 = vpop.f32.mrf.mxu0
  %v1259 = vadd.f32 %v909, %v1258
  %1260 = vmatmul.bf16.gmra.mxu0 %v966
  %v1261 = vpop.f32.mrf.mxu0
  %v1262 = vadd.f32 %v909, %v1261
  %v1263 = vpop.f32.mrf.mxu0
  %v1264 = vadd.f32 %v909, %v1263
  %1265 = vmatmul.bf16.gmra.mxu0 %v969
  %v1266 = vpop.f32.mrf.mxu0
  %v1267 = vadd.f32 %v909, %v1266
  %v1268 = vpop.f32.mrf.mxu0
  %v1269 = vadd.f32 %v909, %v1268
  %1270 = vmatmul.bf16.gmra.mxu0 %v972
  %v1271 = vpop.f32.mrf.mxu0
  %v1272 = vadd.f32 %v909, %v1271
  %v1273 = vpop.f32.mrf.mxu0
  %v1274 = vadd.f32 %v909, %v1273
  %1275 = vmatmul.bf16.gmra.mxu0 %v975
  %v1276 = vpop.f32.mrf.mxu0
  %v1277 = vadd.f32 %v909, %v1276
  %v1278 = vpop.f32.mrf.mxu0
  %v1279 = vadd.f32 %v909, %v1278
  %1280 = vmatmul.bf16.gmra.mxu0 %v978
  %v1281 = vpop.f32.mrf.mxu0
  %v1282 = vadd.f32 %v909, %v1281
  %v1283 = vpop.f32.mrf.mxu0
  %v1284 = vadd.f32 %v909, %v1283
  %1285 = vmatmul.bf16.gmra.mxu0 %v981
  %v1286 = vpop.f32.mrf.mxu0
  %v1287 = vadd.f32 %v909, %v1286
  %v1288 = vpop.f32.mrf.mxu0
  %v1289 = vadd.f32 %v909, %v1288
  %1290 = vmatmul.bf16.gmra.mxu0 %v984
  %v1291 = vpop.f32.mrf.mxu0
  %v1292 = vadd.f32 %v909, %v1291
  %v1293 = vpop.f32.mrf.mxu0
  %v1294 = vadd.f32 %v909, %v1293
  %1295 = vmatmul.bf16.gmra.mxu0 %v987
  %v1296 = vpop.f32.mrf.mxu0
  %v1297 = vadd.f32 %v909, %v1296
  %v1298 = vpop.f32.mrf.mxu0
  %v1299 = vadd.f32 %v909, %v1298
  %1300 = vmatmul.bf16.gmra.mxu0 %v990
  %v1301 = vpop.f32.mrf.mxu0
  %v1302 = vadd.f32 %v909, %v1301
  %v1303 = vpop.f32.mrf.mxu0
  %v1304 = vadd.f32 %v909, %v1303
  %1305 = vmatmul.bf16.gmra.mxu0 %v993
  %v1306 = vpop.f32.mrf.mxu0
  %v1307 = vadd.f32 %v909, %v1306
  %v1308 = vpop.f32.mrf.mxu0
  %v1309 = vadd.f32 %v909, %v1308
  %1310 = vmatmul.bf16.gmra.mxu0 %v996
  %v1311 = vpop.f32.mrf.mxu0
  %v1312 = vadd.f32 %v909, %v1311
  %v1313 = vpop.f32.mrf.mxu0
  %v1314 = vadd.f32 %v909, %v1313
  %1315 = vmatmul.bf16.gmra.mxu0 %v999
  %v1316 = vpop.f32.mrf.mxu0
  %v1317 = vadd.f32 %v909, %v1316
  %v1318 = vpop.f32.mrf.mxu0
  %v1319 = vadd.f32 %v909, %v1318
  %1320 = vmatmul.bf16.gmra.mxu0 %v1002
  %v1321 = vpop.f32.mrf.mxu0
  %v1322 = vadd.f32 %v909, %v1321
  %v1323 = vpop.f32.mrf.mxu0
  %v1324 = vadd.f32 %v909, %v1323
  %1325 = vmatmul.bf16.gmra.mxu0 %v1005
  %v1326 = vpop.f32.mrf.mxu0
  %v1327 = vadd.f32 %v909, %v1326
  %v1328 = vpop.f32.mrf.mxu0
  %v1329 = vadd.f32 %v909, %v1328
  %1330 = vmatmul.bf16.gmra.mxu0 %v1008
  %v1331 = vpop.f32.mrf.mxu0
  %v1332 = vadd.f32 %v909, %v1331
  %v1333 = vpop.f32.mrf.mxu0
  %v1334 = vadd.f32 %v909, %v1333
  %1335 = vmatmul.bf16.gmra.mxu0 %v1011
  %v1336 = vpop.f32.mrf.mxu0
  %v1337 = vadd.f32 %v909, %v1336
  %v1338 = vpop.f32.mrf.mxu0
  %v1339 = vadd.f32 %v909, %v1338
  %1340 = vmatmul.bf16.gmra.mxu0 %v1014
  %v1341 = vpop.f32.mrf.mxu0
  %v1342 = vadd.f32 %v909, %v1341
  %v1343 = vpop.f32.mrf.mxu0
  %v1344 = vadd.f32 %v909, %v1343
  %1345 = vmatmul.bf16.gmra.mxu0 %v1017
  %v1346 = vpop.f32.mrf.mxu0
  %v1347 = vadd.f32 %v909, %v1346
  %v1348 = vpop.f32.mrf.mxu0
  %v1349 = vadd.f32 %v909, %v1348
  %1350 = vmatmul.bf16.gmra.mxu0 %v1020
  %v1351 = vpop.f32.mrf.mxu0
  %v1352 = vadd.f32 %v909, %v1351
  %v1353 = vpop.f32.mrf.mxu0
  %v1354 = vadd.f32 %v909, %v1353
  %1355 = vmatmul.bf16.gmra.mxu0 %v1023
  %v1356 = vpop.f32.mrf.mxu0
  %v1357 = vadd.f32 %v909, %v1356
  %v1358 = vpop.f32.mrf.mxu0
  %v1359 = vadd.f32 %v909, %v1358
  %1360 = vmatmul.bf16.gmra.mxu0 %v1026
  %v1361 = vpop.f32.mrf.mxu0
  %v1362 = vadd.f32 %v909, %v1361
  %v1363 = vpop.f32.mrf.mxu0
  %v1364 = vadd.f32 %v909, %v1363
  %1365 = vdwg.mxu0
  %v1366 = vmax.f32 %v1038, 0.0
  %v1367 = vmax.f32 %v1207, 0.0
  %v1368 = vmax.f32 %v1040, 0.0
  %v1369 = vmax.f32 %v1209, 0.0
  %v1370 = vmax.f32 %v1043, 0.0
  %v1371 = vmax.f32 %v1212, 0.0
  %v1372 = vmax.f32 %v1045, 0.0
  %v1373 = vmax.f32 %v1214, 0.0
  %v1374 = vmax.f32 %v1048, 0.0
  %v1375 = vmax.f32 %v1217, 0.0
  %v1376 = vmax.f32 %v1050, 0.0
  %v1377 = vmax.f32 %v1219, 0.0
  %v1378 = vmax.f32 %v1053, 0.0
  %v1379 = vmax.f32 %v1222, 0.0
  %v1380 = vmax.f32 %v1055, 0.0
  %v1381 = vmax.f32 %v1224, 0.0
  %v1382 = vmax.f32 %v1058, 0.0
  %v1383 = vmax.f32 %v1227, 0.0
  %v1384 = vmax.f32 %v1060, 0.0
  %v1385 = vmax.f32 %v1229, 0.0
  %v1386 = vmax.f32 %v1063, 0.0
  %v1387 = vmax.f32 %v1232, 0.0
  %v1388 = vmax.f32 %v1065, 0.0
  %v1389 = vmax.f32 %v1234, 0.0
  %v1390 = vmax.f32 %v1068, 0.0
  %v1391 = vmax.f32 %v1237, 0.0
  %v1392 = vmax.f32 %v1070, 0.0
  %v1393 = vmax.f32 %v1239, 0.0
  %v1394 = vmax.f32 %v1073, 0.0
  %v1395 = vmax.f32 %v1242, 0.0
  %v1396 = vmax.f32 %v1075, 0.0
  %v1397 = vmax.f32 %v1244, 0.0
  %v1398 = vmax.f32 %v1078, 0.0
  %v1399 = vmax.f32 %v1247, 0.0
  %v1400 = vmax.f32 %v1080, 0.0
  %v1401 = vmax.f32 %v1249, 0.0
  %v1402 = vmax.f32 %v1083, 0.0
  %v1403 = vmax.f32 %v1252, 0.0
  %v1404 = vmax.f32 %v1085, 0.0
  %v1405 = vmax.f32 %v1254, 0.0
  %v1406 = vmax.f32 %v1088, 0.0
  %v1407 = vmax.f32 %v1257, 0.0
  %v1408 = vmax.f32 %v1090, 0.0
  %v1409 = vmax.f32 %v1259, 0.0
  %v1410 = vmax.f32 %v1093, 0.0
  %v1411 = vmax.f32 %v1262, 0.0
  %v1412 = vmax.f32 %v1095, 0.0
  %v1413 = vmax.f32 %v1264, 0.0
  %v1414 = vmax.f32 %v1098, 0.0
  %v1415 = vmax.f32 %v1267, 0.0
  %v1416 = vmax.f32 %v1100, 0.0
  %v1417 = vmax.f32 %v1269, 0.0
  %v1418 = vmax.f32 %v1103, 0.0
  %v1419 = vmax.f32 %v1272, 0.0
  %v1420 = vmax.f32 %v1105, 0.0
  %v1421 = vmax.f32 %v1274, 0.0
  %v1422 = vmax.f32 %v1108, 0.0
  %v1423 = vmax.f32 %v1277, 0.0
  %v1424 = vmax.f32 %v1110, 0.0
  %v1425 = vmax.f32 %v1279, 0.0
  %v1426 = vmax.f32 %v1113, 0.0
  %v1427 = vmax.f32 %v1282, 0.0
  %v1428 = vmax.f32 %v1115, 0.0
  %v1429 = vmax.f32 %v1284, 0.0
  %v1430 = vmax.f32 %v1118, 0.0
  %v1431 = vmax.f32 %v1287, 0.0
  %v1432 = vmax.f32 %v1120, 0.0
  %v1433 = vmax.f32 %v1289, 0.0
  %v1434 = vmax.f32 %v1123, 0.0
  %v1435 = vmax.f32 %v1292, 0.0
  %v1436 = vmax.f32 %v1125, 0.0
  %v1437 = vmax.f32 %v1294, 0.0
  %v1438 = vmax.f32 %v1128, 0.0
  %v1439 = vmax.f32 %v1297, 0.0
  %v1440 = vmax.f32 %v1130, 0.0
  %v1441 = vmax.f32 %v1299, 0.0
  %v1442 = vmax.f32 %v1133, 0.0
  %v1443 = vmax.f32 %v1302, 0.0
  %v1444 = vmax.f32 %v1135, 0.0
  %v1445 = vmax.f32 %v1304, 0.0
  %v1446 = vmax.f32 %v1138, 0.0
  %v1447 = vmax.f32 %v1307, 0.0
  %v1448 = vmax.f32 %v1140, 0.0
  %v1449 = vmax.f32 %v1309, 0.0
  %v1450 = vmax.f32 %v1143, 0.0
  %v1451 = vmax.f32 %v1312, 0.0
  %v1452 = vmax.f32 %v1145, 0.0
  %v1453 = vmax.f32 %v1314, 0.0
  %v1454 = vmax.f32 %v1148, 0.0
  %v1455 = vmax.f32 %v1317, 0.0
  %v1456 = vmax.f32 %v1150, 0.0
  %v1457 = vmax.f32 %v1319, 0.0
  %v1458 = vmax.f32 %v1153, 0.0
  %v1459 = vmax.f32 %v1322, 0.0
  %v1460 = vmax.f32 %v1155, 0.0
  %v1461 = vmax.f32 %v1324, 0.0
  %v1462 = vmax.f32 %v1158, 0.0
  %v1463 = vmax.f32 %v1327, 0.0
  %v1464 = vmax.f32 %v1160, 0.0
  %v1465 = vmax.f32 %v1329, 0.0
  %v1466 = vmax.f32 %v1163, 0.0
  %v1467 = vmax.f32 %v1332, 0.0
  %v1468 = vmax.f32 %v1165, 0.0
  %v1469 = vmax.f32 %v1334, 0.0
  %v1470 = vmax.f32 %v1168, 0.0
  %v1471 = vmax.f32 %v1337, 0.0
  %v1472 = vmax.f32 %v1170, 0.0
  %v1473 = vmax.f32 %v1339, 0.0
  %v1474 = vmax.f32 %v1173, 0.0
  %v1475 = vmax.f32 %v1342, 0.0
  %v1476 = vmax.f32 %v1175, 0.0
  %v1477 = vmax.f32 %v1344, 0.0
  %v1478 = vmax.f32 %v1178, 0.0
  %v1479 = vmax.f32 %v1347, 0.0
  %v1480 = vmax.f32 %v1180, 0.0
  %v1481 = vmax.f32 %v1349, 0.0
  %v1482 = vmax.f32 %v1183, 0.0
  %v1483 = vmax.f32 %v1352, 0.0
  %v1484 = vmax.f32 %v1185, 0.0
  %v1485 = vmax.f32 %v1354, 0.0
  %v1486 = vmax.f32 %v1188, 0.0
  %v1487 = vmax.f32 %v1357, 0.0
  %v1488 = vmax.f32 %v1190, 0.0
  %v1489 = vmax.f32 %v1359, 0.0
  %v1490 = vmax.f32 %v1193, 0.0
  %v1491 = vmax.f32 %v1362, 0.0
  %v1492 = vmax.f32 %v1195, 0.0
  %v1493 = vmax.f32 %v1364, 0.0
  %v1494 = vpack.c.bf16 %v1368, %v1366
  %v1495 = vpack.c.bf16 %v1369, %v1367
  %v1496 = vpack.c.bf16 %v1372, %v1370
  %v1497 = vpack.c.bf16 %v1373, %v1371
  %v1498 = vpack.c.bf16 %v1376, %v1374
  %v1499 = vpack.c.bf16 %v1377, %v1375
  %v1500 = vpack.c.bf16 %v1380, %v1378
  %v1501 = vpack.c.bf16 %v1381, %v1379
  %v1502 = vpack.c.bf16 %v1384, %v1382
  %v1503 = vpack.c.bf16 %v1385, %v1383
  %v1504 = vpack.c.bf16 %v1388, %v1386
  %v1505 = vpack.c.bf16 %v1389, %v1387
  %v1506 = vpack.c.bf16 %v1392, %v1390
  %v1507 = vpack.c.bf16 %v1393, %v1391
  %v1508 = vpack.c.bf16 %v1396, %v1394
  %v1509 = vpack.c.bf16 %v1397, %v1395
  %v1510 = vpack.c.bf16 %v1400, %v1398
  %v1511 = vpack.c.bf16 %v1401, %v1399
  %v1512 = vpack.c.bf16 %v1404, %v1402
  %v1513 = vpack.c.bf16 %v1405, %v1403
  %v1514 = vpack.c.bf16 %v1408, %v1406
  %v1515 = vpack.c.bf16 %v1409, %v1407
  %v1516 = vpack.c.bf16 %v1412, %v1410
  %v1517 = vpack.c.bf16 %v1413, %v1411
  %v1518 = vpack.c.bf16 %v1416, %v1414
  %v1519 = vpack.c.bf16 %v1417, %v1415
  %v1520 = vpack.c.bf16 %v1420, %v1418
  %v1521 = vpack.c.bf16 %v1421, %v1419
  %v1522 = vpack.c.bf16 %v1424, %v1422
  %v1523 = vpack.c.bf16 %v1425, %v1423
  %v1524 = vpack.c.bf16 %v1428, %v1426
  %v1525 = vpack.c.bf16 %v1429, %v1427
  %v1526 = vpack.c.bf16 %v1432, %v1430
  %v1527 = vpack.c.bf16 %v1433, %v1431
  %v1528 = vpack.c.bf16 %v1436, %v1434
  %v1529 = vpack.c.bf16 %v1437, %v1435
  %v1530 = vpack.c.bf16 %v1440, %v1438
  %v1531 = vpack.c.bf16 %v1441, %v1439
  %v1532 = vpack.c.bf16 %v1444, %v1442
  %v1533 = vpack.c.bf16 %v1445, %v1443
  %v1534 = vpack.c.bf16 %v1448, %v1446
  %v1535 = vpack.c.bf16 %v1449, %v1447
  %v1536 = vpack.c.bf16 %v1452, %v1450
  %v1537 = vpack.c.bf16 %v1453, %v1451
  %v1538 = vpack.c.bf16 %v1456, %v1454
  %v1539 = vpack.c.bf16 %v1457, %v1455
  %v1540 = vpack.c.bf16 %v1460, %v1458
  %v1541 = vpack.c.bf16 %v1461, %v1459
  %v1542 = vpack.c.bf16 %v1464, %v1462
  %v1543 = vpack.c.bf16 %v1465, %v1463
  %v1544 = vpack.c.bf16 %v1468, %v1466
  %v1545 = vpack.c.bf16 %v1469, %v1467
  %v1546 = vpack.c.bf16 %v1472, %v1470
  %v1547 = vpack.c.bf16 %v1473, %v1471
  %v1548 = vpack.c.bf16 %v1476, %v1474
  %v1549 = vpack.c.bf16 %v1477, %v1475
  %v1550 = vpack.c.bf16 %v1480, %v1478
  %v1551 = vpack.c.bf16 %v1481, %v1479
  %v1552 = vpack.c.bf16 %v1484, %v1482
  %v1553 = vpack.c.bf16 %v1485, %v1483
  %v1554 = vpack.c.bf16 %v1488, %v1486
  %v1555 = vpack.c.bf16 %v1489, %v1487
  %v1556 = vpack.c.bf16 %v1492, %v1490
  %v1557 = vpack.c.bf16 %v1493, %v1491
  %v1558 = vld [vmem:[%s6] sm:$0xf]
  %v1559 = vld [vmem:[%s6 + $0x4] sm:$0xf]
  %v1560 = vld [vmem:[%s6 + $0x8] sm:$0xf]
  %v1561 = vld [vmem:[%s6 + $0xc] sm:$0xf]
  %v1562 = vld [vmem:[%s6 + $0x10] sm:$0xf]
  %v1563 = vld [vmem:[%s6 + $0x14] sm:$0xf]
  %v1564 = vld [vmem:[%s6 + $0x18] sm:$0xf]
  %v1565 = vld [vmem:[%s6 + $0x1c] sm:$0xf]
  %v1566 = vld [vmem:[%s6 + $0x20] sm:$0xf]
  %v1567 = vld [vmem:[%s6 + $0x24] sm:$0xf]
  %v1568 = vld [vmem:[%s6 + $0x28] sm:$0xf]
  %v1569 = vld [vmem:[%s6 + $0x2c] sm:$0xf]
  %v1570 = vld [vmem:[%s6 + $0x30] sm:$0xf]
  %v1571 = vld [vmem:[%s6 + $0x34] sm:$0xf]
  %v1572 = vld [vmem:[%s6 + $0x38] sm:$0xf]
  %v1573 = vld [vmem:[%s6 + $0x3c] sm:$0xf]
  %v1574 = vld [vmem:[%s6 + $0x40] sm:$0xf]
  %v1575 = vld [vmem:[%s6 + $0x44] sm:$0xf]
  %v1576 = vld [vmem:[%s6 + $0x48] sm:$0xf]
  %v1577 = vld [vmem:[%s6 + $0x4c] sm:$0xf]
  %v1578 = vld [vmem:[%s7] sm:$0x1]
  %v1580 = vperm.slane %v1578, 0
  %v1602 = vunpack.c.l.b16 %v1558
  %v1603 = vunpack.c.l.b16 %v1559
  %v1604 = vunpack.c.l.b16 %v1560
  %v1605 = vunpack.c.l.b16 %v1561
  %v1606 = vunpack.c.l.b16 %v1562
  %v1607 = vunpack.c.l.b16 %v1563
  %v1608 = vunpack.c.l.b16 %v1564
  %v1609 = vunpack.c.l.b16 %v1565
  %v1610 = vunpack.c.l.b16 %v1566
  %v1611 = vunpack.c.l.b16 %v1567
  %v1612 = vunpack.c.l.b16 %v1568
  %v1613 = vunpack.c.l.b16 %v1569
  %v1614 = vunpack.c.l.b16 %v1570
  %v1615 = vunpack.c.l.b16 %v1571
  %v1616 = vunpack.c.l.b16 %v1572
  %v1617 = vunpack.c.l.b16 %v1573
  %v1618 = vunpack.c.l.b16 %v1574
  %v1619 = vunpack.c.l.b16 %v1575
  %v1620 = vunpack.c.l.b16 %v1576
  %v1621 = vunpack.c.l.b16 %v1577
  %v1622 = vpack.c.b16 %v1603, %v1602
  %v1623 = vpack.c.b16 %v1605, %v1604
  %v1624 = vpack.c.b16 %v1607, %v1606
  %v1625 = vpack.c.b16 %v1609, %v1608
  %v1626 = vpack.c.b16 %v1611, %v1610
  %v1627 = vpack.c.b16 %v1613, %v1612
  %v1628 = vpack.c.b16 %v1615, %v1614
  %v1629 = vpack.c.b16 %v1617, %v1616
  %v1630 = vpack.c.b16 %v1619, %v1618
  %v1631 = vpack.c.b16 %v1621, %v1620
  %v1643 = vsel %vm540, %v1495, 0
  %v1646 = vsel %vm540, %v1497, 0
  %v1649 = vsel %vm540, %v1499, 0
  %v1652 = vsel %vm540, %v1501, 0
  %v1655 = vsel %vm540, %v1503, 0
  %v1658 = vsel %vm540, %v1505, 0
  %v1661 = vsel %vm540, %v1507, 0
  %v1664 = vsel %vm540, %v1509, 0
  %v1667 = vsel %vm540, %v1511, 0
  %v1670 = vsel %vm540, %v1513, 0
  %v1673 = vsel %vm540, %v1515, 0
  %v1676 = vsel %vm540, %v1517, 0
  %v1679 = vsel %vm540, %v1519, 0
  %v1682 = vsel %vm540, %v1521, 0
  %v1685 = vsel %vm540, %v1523, 0
  %v1688 = vsel %vm540, %v1525, 0
  %v1691 = vsel %vm540, %v1527, 0
  %v1694 = vsel %vm540, %v1529, 0
  %v1697 = vsel %vm540, %v1531, 0
  %v1700 = vsel %vm540, %v1533, 0
  %v1703 = vsel %vm540, %v1535, 0
  %v1706 = vsel %vm540, %v1537, 0
  %v1709 = vsel %vm540, %v1539, 0
  %v1712 = vsel %vm540, %v1541, 0
  %v1715 = vsel %vm540, %v1543, 0
  %v1718 = vsel %vm540, %v1545, 0
  %v1721 = vsel %vm540, %v1547, 0
  %v1724 = vsel %vm540, %v1549, 0
  %v1727 = vsel %vm540, %v1551, 0
  %v1730 = vsel %vm540, %v1553, 0
  %v1733 = vsel %vm540, %v1555, 0
  %v1736 = vsel %vm540, %v1557, 0
  %1738 = vmatpush.bf16.msra.mxu0 %v1629
  %1739 = vmatpush.bf16.msra.mxu0 %v1628
  %1740 = vmatpush.bf16.msra.mxu0 %v1627
  %1741 = vmatpush.bf16.msra.mxu0 %v1626
  %1742 = vmatpush.bf16.msra.mxu0 %v1625
  %1743 = vmatpush.bf16.msra.mxu0 %v1624
  %1744 = vmatpush.bf16.msra.mxu0 %v1623
  %1745 = vmatpush.bf16.msra.mxu0 %v1622
  %1746 = vmatmul.bf16.gmra.mxu0 %v1494
  %v1747 = vpop.f32.mrf.mxu0
  %v1748 = vadd.f32 %v1580, %v1747
  %v1749 = vpop.f32.mrf.mxu0
  %v1750 = vadd.f32 %v1580, %v1749
  %1751 = vmatmul.bf16.gmra.mxu0 %v1496
  %v1752 = vpop.f32.mrf.mxu0
  %v1753 = vadd.f32 %v1580, %v1752
  %v1754 = vpop.f32.mrf.mxu0
  %v1755 = vadd.f32 %v1580, %v1754
  %1756 = vmatmul.bf16.gmra.mxu0 %v1498
  %v1757 = vpop.f32.mrf.mxu0
  %v1758 = vadd.f32 %v1580, %v1757
  %v1759 = vpop.f32.mrf.mxu0
  %v1760 = vadd.f32 %v1580, %v1759
  %1761 = vmatmul.bf16.gmra.mxu0 %v1500
  %v1762 = vpop.f32.mrf.mxu0
  %v1763 = vadd.f32 %v1580, %v1762
  %v1764 = vpop.f32.mrf.mxu0
  %v1765 = vadd.f32 %v1580, %v1764
  %1766 = vmatmul.bf16.gmra.mxu0 %v1502
  %v1767 = vpop.f32.mrf.mxu0
  %v1768 = vadd.f32 %v1580, %v1767
  %v1769 = vpop.f32.mrf.mxu0
  %v1770 = vadd.f32 %v1580, %v1769
  %1771 = vmatmul.bf16.gmra.mxu0 %v1504
  %v1772 = vpop.f32.mrf.mxu0
  %v1773 = vadd.f32 %v1580, %v1772
  %v1774 = vpop.f32.mrf.mxu0
  %v1775 = vadd.f32 %v1580, %v1774
  %1776 = vmatmul.bf16.gmra.mxu0 %v1506
  %v1777 = vpop.f32.mrf.mxu0
  %v1778 = vadd.f32 %v1580, %v1777
  %v1779 = vpop.f32.mrf.mxu0
  %v1780 = vadd.f32 %v1580, %v1779
  %1781 = vmatmul.bf16.gmra.mxu0 %v1508
  %v1782 = vpop.f32.mrf.mxu0
  %v1783 = vadd.f32 %v1580, %v1782
  %v1784 = vpop.f32.mrf.mxu0
  %v1785 = vadd.f32 %v1580, %v1784
  %1786 = vmatmul.bf16.gmra.mxu0 %v1510
  %v1787 = vpop.f32.mrf.mxu0
  %v1788 = vadd.f32 %v1580, %v1787
  %v1789 = vpop.f32.mrf.mxu0
  %v1790 = vadd.f32 %v1580, %v1789
  %1791 = vmatmul.bf16.gmra.mxu0 %v1512
  %v1792 = vpop.f32.mrf.mxu0
  %v1793 = vadd.f32 %v1580, %v1792
  %v1794 = vpop.f32.mrf.mxu0
  %v1795 = vadd.f32 %v1580, %v1794
  %1796 = vmatmul.bf16.gmra.mxu0 %v1514
  %v1797 = vpop.f32.mrf.mxu0
  %v1798 = vadd.f32 %v1580, %v1797
  %v1799 = vpop.f32.mrf.mxu0
  %v1800 = vadd.f32 %v1580, %v1799
  %1801 = vmatmul.bf16.gmra.mxu0 %v1516
  %v1802 = vpop.f32.mrf.mxu0
  %v1803 = vadd.f32 %v1580, %v1802
  %v1804 = vpop.f32.mrf.mxu0
  %v1805 = vadd.f32 %v1580, %v1804
  %1806 = vmatmul.bf16.gmra.mxu0 %v1518
  %v1807 = vpop.f32.mrf.mxu0
  %v1808 = vadd.f32 %v1580, %v1807
  %v1809 = vpop.f32.mrf.mxu0
  %v1810 = vadd.f32 %v1580, %v1809
  %1811 = vmatmul.bf16.gmra.mxu0 %v1520
  %v1812 = vpop.f32.mrf.mxu0
  %v1813 = vadd.f32 %v1580, %v1812
  %v1814 = vpop.f32.mrf.mxu0
  %v1815 = vadd.f32 %v1580, %v1814
  %1816 = vmatmul.bf16.gmra.mxu0 %v1522
  %v1817 = vpop.f32.mrf.mxu0
  %v1818 = vadd.f32 %v1580, %v1817
  %v1819 = vpop.f32.mrf.mxu0
  %v1820 = vadd.f32 %v1580, %v1819
  %1821 = vmatmul.bf16.gmra.mxu0 %v1524
  %v1822 = vpop.f32.mrf.mxu0
  %v1823 = vadd.f32 %v1580, %v1822
  %v1824 = vpop.f32.mrf.mxu0
  %v1825 = vadd.f32 %v1580, %v1824
  %1826 = vmatmul.bf16.gmra.mxu0 %v1526
  %v1827 = vpop.f32.mrf.mxu0
  %v1828 = vadd.f32 %v1580, %v1827
  %v1829 = vpop.f32.mrf.mxu0
  %v1830 = vadd.f32 %v1580, %v1829
  %1831 = vmatmul.bf16.gmra.mxu0 %v1528
  %v1832 = vpop.f32.mrf.mxu0
  %v1833 = vadd.f32 %v1580, %v1832
  %v1834 = vpop.f32.mrf.mxu0
  %v1835 = vadd.f32 %v1580, %v1834
  %1836 = vmatmul.bf16.gmra.mxu0 %v1530
  %v1837 = vpop.f32.mrf.mxu0
  %v1838 = vadd.f32 %v1580, %v1837
  %v1839 = vpop.f32.mrf.mxu0
  %v1840 = vadd.f32 %v1580, %v1839
  %1841 = vmatmul.bf16.gmra.mxu0 %v1532
  %v1842 = vpop.f32.mrf.mxu0
  %v1843 = vadd.f32 %v1580, %v1842
  %v1844 = vpop.f32.mrf.mxu0
  %v1845 = vadd.f32 %v1580, %v1844
  %1846 = vmatmul.bf16.gmra.mxu0 %v1534
  %v1847 = vpop.f32.mrf.mxu0
  %v1848 = vadd.f32 %v1580, %v1847
  %v1849 = vpop.f32.mrf.mxu0
  %v1850 = vadd.f32 %v1580, %v1849
  %1851 = vmatmul.bf16.gmra.mxu0 %v1536
  %v1852 = vpop.f32.mrf.mxu0
  %v1853 = vadd.f32 %v1580, %v1852
  %v1854 = vpop.f32.mrf.mxu0
  %v1855 = vadd.f32 %v1580, %v1854
  %1856 = vmatmul.bf16.gmra.mxu0 %v1538
  %v1857 = vpop.f32.mrf.mxu0
  %v1858 = vadd.f32 %v1580, %v1857
  %v1859 = vpop.f32.mrf.mxu0
  %v1860 = vadd.f32 %v1580, %v1859
  %1861 = vmatmul.bf16.gmra.mxu0 %v1540
  %v1862 = vpop.f32.mrf.mxu0
  %v1863 = vadd.f32 %v1580, %v1862
  %v1864 = vpop.f32.mrf.mxu0
  %v1865 = vadd.f32 %v1580, %v1864
  %1866 = vmatmul.bf16.gmra.mxu0 %v1542
  %v1867 = vpop.f32.mrf.mxu0
  %v1868 = vadd.f32 %v1580, %v1867
  %v1869 = vpop.f32.mrf.mxu0
  %v1870 = vadd.f32 %v1580, %v1869
  %1871 = vmatmul.bf16.gmra.mxu0 %v1544
  %v1872 = vpop.f32.mrf.mxu0
  %v1873 = vadd.f32 %v1580, %v1872
  %v1874 = vpop.f32.mrf.mxu0
  %v1875 = vadd.f32 %v1580, %v1874
  %1876 = vmatmul.bf16.gmra.mxu0 %v1546
  %v1877 = vpop.f32.mrf.mxu0
  %v1878 = vadd.f32 %v1580, %v1877
  %v1879 = vpop.f32.mrf.mxu0
  %v1880 = vadd.f32 %v1580, %v1879
  %1881 = vmatmul.bf16.gmra.mxu0 %v1548
  %v1882 = vpop.f32.mrf.mxu0
  %v1883 = vadd.f32 %v1580, %v1882
  %v1884 = vpop.f32.mrf.mxu0
  %v1885 = vadd.f32 %v1580, %v1884
  %1886 = vmatmul.bf16.gmra.mxu0 %v1550
  %v1887 = vpop.f32.mrf.mxu0
  %v1888 = vadd.f32 %v1580, %v1887
  %v1889 = vpop.f32.mrf.mxu0
  %v1890 = vadd.f32 %v1580, %v1889
  %1891 = vmatmul.bf16.gmra.mxu0 %v1552
  %v1892 = vpop.f32.mrf.mxu0
  %v1893 = vadd.f32 %v1580, %v1892
  %v1894 = vpop.f32.mrf.mxu0
  %v1895 = vadd.f32 %v1580, %v1894
  %1896 = vmatmul.bf16.gmra.mxu0 %v1554
  %v1897 = vpop.f32.mrf.mxu0
  %v1898 = vadd.f32 %v1580, %v1897
  %v1899 = vpop.f32.mrf.mxu0
  %v1900 = vadd.f32 %v1580, %v1899
  %1901 = vmatmul.bf16.gmra.mxu0 %v1556
  %v1902 = vpop.f32.mrf.mxu0
  %v1903 = vadd.f32 %v1580, %v1902
  %v1904 = vpop.f32.mrf.mxu0
  %v1905 = vadd.f32 %v1580, %v1904
  %1906 = vdwg.mxu0
  %1907 = vmatpush.bf16.msra.mxu0 0
  %1908 = vmatpush.bf16.msra.mxu0 0
  %1909 = vmatpush.bf16.msra.mxu0 0
  %1910 = vmatpush.bf16.msra.mxu0 0
  %1911 = vmatpush.bf16.msra.mxu0 0
  %1912 = vmatpush.bf16.msra.mxu0 0
  %1913 = vmatpush.bf16.msra.mxu0 %v1631
  %1914 = vmatpush.bf16.msra.mxu0 %v1630
  %1915 = vmatmul.bf16.gmra.mxu0 %v1643
  %v1916 = vpop.f32.mrf.mxu0
  %v1917 = vadd.f32 %v1748, %v1916
  %v1918 = vpop.f32.mrf.mxu0
  %v1919 = vadd.f32 %v1750, %v1918
  %1920 = vmatmul.bf16.gmra.mxu0 %v1646
  %v1921 = vpop.f32.mrf.mxu0
  %v1922 = vadd.f32 %v1753, %v1921
  %v1923 = vpop.f32.mrf.mxu0
  %v1924 = vadd.f32 %v1755, %v1923
  %1925 = vmatmul.bf16.gmra.mxu0 %v1649
  %v1926 = vpop.f32.mrf.mxu0
  %v1927 = vadd.f32 %v1758, %v1926
  %v1928 = vpop.f32.mrf.mxu0
  %v1929 = vadd.f32 %v1760, %v1928
  %1930 = vmatmul.bf16.gmra.mxu0 %v1652
  %v1931 = vpop.f32.mrf.mxu0
  %v1932 = vadd.f32 %v1763, %v1931
  %v1933 = vpop.f32.mrf.mxu0
  %v1934 = vadd.f32 %v1765, %v1933
  %1935 = vmatmul.bf16.gmra.mxu0 %v1655
  %v1936 = vpop.f32.mrf.mxu0
  %v1937 = vadd.f32 %v1768, %v1936
  %v1938 = vpop.f32.mrf.mxu0
  %v1939 = vadd.f32 %v1770, %v1938
  %1940 = vmatmul.bf16.gmra.mxu0 %v1658
  %v1941 = vpop.f32.mrf.mxu0
  %v1942 = vadd.f32 %v1773, %v1941
  %v1943 = vpop.f32.mrf.mxu0
  %v1944 = vadd.f32 %v1775, %v1943
  %1945 = vmatmul.bf16.gmra.mxu0 %v1661
  %v1946 = vpop.f32.mrf.mxu0
  %v1947 = vadd.f32 %v1778, %v1946
  %v1948 = vpop.f32.mrf.mxu0
  %v1949 = vadd.f32 %v1780, %v1948
  %1950 = vmatmul.bf16.gmra.mxu0 %v1664
  %v1951 = vpop.f32.mrf.mxu0
  %v1952 = vadd.f32 %v1783, %v1951
  %v1953 = vpop.f32.mrf.mxu0
  %v1954 = vadd.f32 %v1785, %v1953
  %1955 = vmatmul.bf16.gmra.mxu0 %v1667
  %v1956 = vpop.f32.mrf.mxu0
  %v1957 = vadd.f32 %v1788, %v1956
  %v1958 = vpop.f32.mrf.mxu0
  %v1959 = vadd.f32 %v1790, %v1958
  %1960 = vmatmul.bf16.gmra.mxu0 %v1670
  %v1961 = vpop.f32.mrf.mxu0
  %v1962 = vadd.f32 %v1793, %v1961
  %v1963 = vpop.f32.mrf.mxu0
  %v1964 = vadd.f32 %v1795, %v1963
  %1965 = vmatmul.bf16.gmra.mxu0 %v1673
  %v1966 = vpop.f32.mrf.mxu0
  %v1967 = vadd.f32 %v1798, %v1966
  %v1968 = vpop.f32.mrf.mxu0
  %v1969 = vadd.f32 %v1800, %v1968
  %1970 = vmatmul.bf16.gmra.mxu0 %v1676
  %v1971 = vpop.f32.mrf.mxu0
  %v1972 = vadd.f32 %v1803, %v1971
  %v1973 = vpop.f32.mrf.mxu0
  %v1974 = vadd.f32 %v1805, %v1973
  %1975 = vmatmul.bf16.gmra.mxu0 %v1679
  %v1976 = vpop.f32.mrf.mxu0
  %v1977 = vadd.f32 %v1808, %v1976
  %v1978 = vpop.f32.mrf.mxu0
  %v1979 = vadd.f32 %v1810, %v1978
  %1980 = vmatmul.bf16.gmra.mxu0 %v1682
  %v1981 = vpop.f32.mrf.mxu0
  %v1982 = vadd.f32 %v1813, %v1981
  %v1983 = vpop.f32.mrf.mxu0
  %v1984 = vadd.f32 %v1815, %v1983
  %1985 = vmatmul.bf16.gmra.mxu0 %v1685
  %v1986 = vpop.f32.mrf.mxu0
  %v1987 = vadd.f32 %v1818, %v1986
  %v1988 = vpop.f32.mrf.mxu0
  %v1989 = vadd.f32 %v1820, %v1988
  %1990 = vmatmul.bf16.gmra.mxu0 %v1688
  %v1991 = vpop.f32.mrf.mxu0
  %v1992 = vadd.f32 %v1823, %v1991
  %v1993 = vpop.f32.mrf.mxu0
  %v1994 = vadd.f32 %v1825, %v1993
  %1995 = vmatmul.bf16.gmra.mxu0 %v1691
  %v1996 = vpop.f32.mrf.mxu0
  %v1997 = vadd.f32 %v1828, %v1996
  %v1998 = vpop.f32.mrf.mxu0
  %v1999 = vadd.f32 %v1830, %v1998
  %2000 = vmatmul.bf16.gmra.mxu0 %v1694
  %v2001 = vpop.f32.mrf.mxu0
  %v2002 = vadd.f32 %v1833, %v2001
  %v2003 = vpop.f32.mrf.mxu0
  %v2004 = vadd.f32 %v1835, %v2003
  %2005 = vmatmul.bf16.gmra.mxu0 %v1697
  %v2006 = vpop.f32.mrf.mxu0
  %v2007 = vadd.f32 %v1838, %v2006
  %v2008 = vpop.f32.mrf.mxu0
  %v2009 = vadd.f32 %v1840, %v2008
  %2010 = vmatmul.bf16.gmra.mxu0 %v1700
  %v2011 = vpop.f32.mrf.mxu0
  %v2012 = vadd.f32 %v1843, %v2011
  %v2013 = vpop.f32.mrf.mxu0
  %v2014 = vadd.f32 %v1845, %v2013
  %2015 = vmatmul.bf16.gmra.mxu0 %v1703
  %v2016 = vpop.f32.mrf.mxu0
  %v2017 = vadd.f32 %v1848, %v2016
  %v2018 = vpop.f32.mrf.mxu0
  %v2019 = vadd.f32 %v1850, %v2018
  %2020 = vmatmul.bf16.gmra.mxu0 %v1706
  %v2021 = vpop.f32.mrf.mxu0
  %v2022 = vadd.f32 %v1853, %v2021
  %v2023 = vpop.f32.mrf.mxu0
  %v2024 = vadd.f32 %v1855, %v2023
  %2025 = vmatmul.bf16.gmra.mxu0 %v1709
  %v2026 = vpop.f32.mrf.mxu0
  %v2027 = vadd.f32 %v1858, %v2026
  %v2028 = vpop.f32.mrf.mxu0
  %v2029 = vadd.f32 %v1860, %v2028
  %2030 = vmatmul.bf16.gmra.mxu0 %v1712
  %v2031 = vpop.f32.mrf.mxu0
  %v2032 = vadd.f32 %v1863, %v2031
  %v2033 = vpop.f32.mrf.mxu0
  %v2034 = vadd.f32 %v1865, %v2033
  %2035 = vmatmul.bf16.gmra.mxu0 %v1715
  %v2036 = vpop.f32.mrf.mxu0
  %v2037 = vadd.f32 %v1868, %v2036
  %v2038 = vpop.f32.mrf.mxu0
  %v2039 = vadd.f32 %v1870, %v2038
  %2040 = vmatmul.bf16.gmra.mxu0 %v1718
  %v2041 = vpop.f32.mrf.mxu0
  %v2042 = vadd.f32 %v1873, %v2041
  %v2043 = vpop.f32.mrf.mxu0
  %v2044 = vadd.f32 %v1875, %v2043
  %2045 = vmatmul.bf16.gmra.mxu0 %v1721
  %v2046 = vpop.f32.mrf.mxu0
  %v2047 = vadd.f32 %v1878, %v2046
  %v2048 = vpop.f32.mrf.mxu0
  %v2049 = vadd.f32 %v1880, %v2048
  %2050 = vmatmul.bf16.gmra.mxu0 %v1724
  %v2051 = vpop.f32.mrf.mxu0
  %v2052 = vadd.f32 %v1883, %v2051
  %v2053 = vpop.f32.mrf.mxu0
  %v2054 = vadd.f32 %v1885, %v2053
  %2055 = vmatmul.bf16.gmra.mxu0 %v1727
  %v2056 = vpop.f32.mrf.mxu0
  %v2057 = vadd.f32 %v1888, %v2056
  %v2058 = vpop.f32.mrf.mxu0
  %v2059 = vadd.f32 %v1890, %v2058
  %2060 = vmatmul.bf16.gmra.mxu0 %v1730
  %v2061 = vpop.f32.mrf.mxu0
  %v2062 = vadd.f32 %v1893, %v2061
  %v2063 = vpop.f32.mrf.mxu0
  %v2064 = vadd.f32 %v1895, %v2063
  %2065 = vmatmul.bf16.gmra.mxu0 %v1733
  %v2066 = vpop.f32.mrf.mxu0
  %v2067 = vadd.f32 %v1898, %v2066
  %v2068 = vpop.f32.mrf.mxu0
  %v2069 = vadd.f32 %v1900, %v2068
  %2070 = vmatmul.bf16.gmra.mxu0 %v1736
  %v2071 = vpop.f32.mrf.mxu0
  %v2072 = vadd.f32 %v1903, %v2071
  %v2073 = vpop.f32.mrf.mxu0
  %v2074 = vadd.f32 %v1905, %v2073
  %2075 = vdwg.mxu0
  %v2076 = vadd.f32 %v30, %v1917
  %v2077 = vadd.f32 %v31, %v1919
  %v2078 = vadd.f32 %v32, %v1922
  %v2079 = vadd.f32 %v33, %v1924
  %v2080 = vadd.f32 %v34, %v1927
  %v2081 = vadd.f32 %v35, %v1929
  %v2082 = vadd.f32 %v36, %v1932
  %v2083 = vadd.f32 %v37, %v1934
  %v2084 = vadd.f32 %v38, %v1937
  %v2085 = vadd.f32 %v39, %v1939
  %v2086 = vadd.f32 %v40, %v1942
  %v2087 = vadd.f32 %v41, %v1944
  %v2088 = vadd.f32 %v42, %v1947
  %v2089 = vadd.f32 %v43, %v1949
  %v2090 = vadd.f32 %v44, %v1952
  %v2091 = vadd.f32 %v45, %v1954
  %v2092 = vadd.f32 %v46, %v1957
  %v2093 = vadd.f32 %v47, %v1959
  %v2094 = vadd.f32 %v48, %v1962
  %v2095 = vadd.f32 %v49, %v1964
  %v2096 = vadd.f32 %v50, %v1967
  %v2097 = vadd.f32 %v51, %v1969
  %v2098 = vadd.f32 %v52, %v1972
  %v2099 = vadd.f32 %v53, %v1974
  %v2100 = vadd.f32 %v54, %v1977
  %v2101 = vadd.f32 %v55, %v1979
  %v2102 = vadd.f32 %v56, %v1982
  %v2103 = vadd.f32 %v57, %v1984
  %v2104 = vadd.f32 %v58, %v1987
  %v2105 = vadd.f32 %v59, %v1989
  %v2106 = vadd.f32 %v60, %v1992
  %v2107 = vadd.f32 %v61, %v1994
  %v2108 = vadd.f32 %v62, %v1997
  %v2109 = vadd.f32 %v63, %v1999
  %v2110 = vadd.f32 %v64, %v2002
  %v2111 = vadd.f32 %v65, %v2004
  %v2112 = vadd.f32 %v66, %v2007
  %v2113 = vadd.f32 %v67, %v2009
  %v2114 = vadd.f32 %v68, %v2012
  %v2115 = vadd.f32 %v69, %v2014
  %v2116 = vadd.f32 %v70, %v2017
  %v2117 = vadd.f32 %v71, %v2019
  %v2118 = vadd.f32 %v72, %v2022
  %v2119 = vadd.f32 %v73, %v2024
  %v2120 = vadd.f32 %v74, %v2027
  %v2121 = vadd.f32 %v75, %v2029
  %v2122 = vadd.f32 %v76, %v2032
  %v2123 = vadd.f32 %v77, %v2034
  %v2124 = vadd.f32 %v78, %v2037
  %v2125 = vadd.f32 %v79, %v2039
  %v2126 = vadd.f32 %v80, %v2042
  %v2127 = vadd.f32 %v81, %v2044
  %v2128 = vadd.f32 %v82, %v2047
  %v2129 = vadd.f32 %v83, %v2049
  %v2130 = vadd.f32 %v84, %v2052
  %v2131 = vadd.f32 %v85, %v2054
  %v2132 = vadd.f32 %v86, %v2057
  %v2133 = vadd.f32 %v87, %v2059
  %v2134 = vadd.f32 %v88, %v2062
  %v2135 = vadd.f32 %v89, %v2064
  %v2136 = vadd.f32 %v90, %v2067
  %v2137 = vadd.f32 %v91, %v2069
  %v2138 = vadd.f32 %v92, %v2072
  %v2139 = vadd.f32 %v93, %v2074
  %2140 = vst.msk [vmem:[%s8] sm:$0xff] %vm158, %v2076
  %2141 = vst.msk [vmem:[%s8 + $0x8] sm:$0xff] %vm158, %v2077
  %2142 = vst.msk [vmem:[%s8 + $0x10] sm:$0xff] %vm158, %v2078
  %2143 = vst.msk [vmem:[%s8 + $0x18] sm:$0xff] %vm158, %v2079
  %2144 = vst.msk [vmem:[%s8 + $0x20] sm:$0xff] %vm158, %v2080
  %2145 = vst.msk [vmem:[%s8 + $0x28] sm:$0xff] %vm158, %v2081
  %2146 = vst.msk [vmem:[%s8 + $0x30] sm:$0xff] %vm158, %v2082
  %2147 = vst.msk [vmem:[%s8 + $0x38] sm:$0xff] %vm158, %v2083
  %2148 = vst.msk [vmem:[%s8 + $0x40] sm:$0xff] %vm158, %v2084
  %2149 = vst.msk [vmem:[%s8 + $0x48] sm:$0xff] %vm158, %v2085
  %2150 = vst.msk [vmem:[%s8 + $0x50] sm:$0xff] %vm158, %v2086
  %2151 = vst.msk [vmem:[%s8 + $0x58] sm:$0xff] %vm158, %v2087
  %2152 = vst.msk [vmem:[%s8 + $0x60] sm:$0xff] %vm158, %v2088
  %2153 = vst.msk [vmem:[%s8 + $0x68] sm:$0xff] %vm158, %v2089
  %2154 = vst.msk [vmem:[%s8 + $0x70] sm:$0xff] %vm158, %v2090
  %2155 = vst.msk [vmem:[%s8 + $0x78] sm:$0xff] %vm158, %v2091
  %2156 = vst.msk [vmem:[%s8 + $0x80] sm:$0xff] %vm158, %v2092
  %2157 = vst.msk [vmem:[%s8 + $0x88] sm:$0xff] %vm158, %v2093
  %2158 = vst.msk [vmem:[%s8 + $0x90] sm:$0xff] %vm158, %v2094
  %2159 = vst.msk [vmem:[%s8 + $0x98] sm:$0xff] %vm158, %v2095
  %2160 = vst.msk [vmem:[%s8 + $0xa0] sm:$0xff] %vm158, %v2096
  %2161 = vst.msk [vmem:[%s8 + $0xa8] sm:$0xff] %vm158, %v2097
  %2162 = vst.msk [vmem:[%s8 + $0xb0] sm:$0xff] %vm158, %v2098
  %2163 = vst.msk [vmem:[%s8 + $0xb8] sm:$0xff] %vm158, %v2099
  %2164 = vst.msk [vmem:[%s8 + $0xc0] sm:$0xff] %vm158, %v2100
  %2165 = vst.msk [vmem:[%s8 + $0xc8] sm:$0xff] %vm158, %v2101
  %2166 = vst.msk [vmem:[%s8 + $0xd0] sm:$0xff] %vm158, %v2102
  %2167 = vst.msk [vmem:[%s8 + $0xd8] sm:$0xff] %vm158, %v2103
  %2168 = vst.msk [vmem:[%s8 + $0xe0] sm:$0xff] %vm158, %v2104
  %2169 = vst.msk [vmem:[%s8 + $0xe8] sm:$0xff] %vm158, %v2105
  %2170 = vst.msk [vmem:[%s8 + $0xf0] sm:$0xff] %vm158, %v2106
  %2171 = vst.msk [vmem:[%s8 + $0xf8] sm:$0xff] %vm158, %v2107
  %2172 = vst.msk [vmem:[%s8 + $0x100] sm:$0xff] %vm158, %v2108
  %2173 = vst.msk [vmem:[%s8 + $0x108] sm:$0xff] %vm158, %v2109
  %2174 = vst.msk [vmem:[%s8 + $0x110] sm:$0xff] %vm158, %v2110
  %2175 = vst.msk [vmem:[%s8 + $0x118] sm:$0xff] %vm158, %v2111
  %2176 = vst.msk [vmem:[%s8 + $0x120] sm:$0xff] %vm158, %v2112
  %2177 = vst.msk [vmem:[%s8 + $0x128] sm:$0xff] %vm158, %v2113
  %2178 = vst.msk [vmem:[%s8 + $0x130] sm:$0xff] %vm158, %v2114
  %2179 = vst.msk [vmem:[%s8 + $0x138] sm:$0xff] %vm158, %v2115
  %2180 = vst.msk [vmem:[%s8 + $0x140] sm:$0xff] %vm158, %v2116
  %2181 = vst.msk [vmem:[%s8 + $0x148] sm:$0xff] %vm158, %v2117
  %2182 = vst.msk [vmem:[%s8 + $0x150] sm:$0xff] %vm158, %v2118
  %2183 = vst.msk [vmem:[%s8 + $0x158] sm:$0xff] %vm158, %v2119
  %2184 = vst.msk [vmem:[%s8 + $0x160] sm:$0xff] %vm158, %v2120
  %2185 = vst.msk [vmem:[%s8 + $0x168] sm:$0xff] %vm158, %v2121
  %2186 = vst.msk [vmem:[%s8 + $0x170] sm:$0xff] %vm158, %v2122
  %2187 = vst.msk [vmem:[%s8 + $0x178] sm:$0xff] %vm158, %v2123
  %2188 = vst.msk [vmem:[%s8 + $0x180] sm:$0xff] %vm158, %v2124
  %2189 = vst.msk [vmem:[%s8 + $0x188] sm:$0xff] %vm158, %v2125
  %2190 = vst.msk [vmem:[%s8 + $0x190] sm:$0xff] %vm158, %v2126
  %2191 = vst.msk [vmem:[%s8 + $0x198] sm:$0xff] %vm158, %v2127
  %2192 = vst.msk [vmem:[%s8 + $0x1a0] sm:$0xff] %vm158, %v2128
  %2193 = vst.msk [vmem:[%s8 + $0x1a8] sm:$0xff] %vm158, %v2129
  %2194 = vst.msk [vmem:[%s8 + $0x1b0] sm:$0xff] %vm158, %v2130
  %2195 = vst.msk [vmem:[%s8 + $0x1b8] sm:$0xff] %vm158, %v2131
  %2196 = vst.msk [vmem:[%s8 + $0x1c0] sm:$0xff] %vm158, %v2132
  %2197 = vst.msk [vmem:[%s8 + $0x1c8] sm:$0xff] %vm158, %v2133
  %2198 = vst.msk [vmem:[%s8 + $0x1d0] sm:$0xff] %vm158, %v2134
  %2199 = vst.msk [vmem:[%s8 + $0x1d8] sm:$0xff] %vm158, %v2135
  %2200 = vst.msk [vmem:[%s8 + $0x1e0] sm:$0xff] %vm158, %v2136
  %2201 = vst.msk [vmem:[%s8 + $0x1e8] sm:$0xff] %vm158, %v2137
  %2202 = vst.msk [vmem:[%s8 + $0x1f0] sm:$0xff] %vm158, %v2138
  %2203 = vst.msk [vmem:[%s8 + $0x1f8] sm:$0xff] %vm158, %v2139
  // Predicated region
  $region34: #{_deform_forward_jit.1} parent=0 // pred_check
    _
  $region35: #{_deform_forward_jit.1} parent=0 // pred_check_branch
    %2205 = sbr.rel (0) target = $region37
  $region36: #{_deform_forward_jit.1} parent=0 // pred_region
    _
  $region37: #{_deform_forward_jit.1} parent=0 // pred_fallthru
    _
  // Predicated region
  $region38: #{_deform_forward_jit.1} parent=0 // pred_check
    _
  $region39: #{_deform_forward_jit.1} parent=0 // pred_check_branch
    %2207 = sbr.rel (0) target = $region41
  $region40: #{_deform_forward_jit.1} parent=0 // pred_region
    _
  $region41: #{_deform_forward_jit.1} parent=0 // pred_fallthru
    _

</llo_original>
